<compile_context>
chip_gen: v6e
topology: v6e:2x2x1
jax: 0.10.0
libtpu: 0.0.40
codegen_flags: <defaults>
</compile_context>

<pallas_src>
import jax
import jax.numpy as jnp
from jax.experimental import pallas as pl
from jax.experimental.pallas import tpu as pltpu

LAYER_SIZES = [784, 512, 256, 128, 64, 10]
NEG_SLOPE = 0.01          # F.leaky_relu default negative_slope

# Padded per-layer (in, out) dims as seen by the kernel.  Zero-padded rows/cols
# (layer-4 output 64->128, layer-5 input 64->128 and output 10->128) contribute
# exactly zero, so results are identical to the unpadded net.
PADDED_DIMS = [(784, 512), (512, 256), (256, 128), (128, 128), (128, 128)]
OUT_PAD = PADDED_DIMS[-1][1]     # 128 -> lane-dense final stores
MAX_TILE_B = 512                 # amortizes per-grid-step overhead (v6e)


def _round_up(x, m):
    return (x + m - 1) // m * m


def _choose_tile_b(batch):
    """Adaptive batch tile: multiple of 16 (bf16 sublane), capped at MAX_TILE_B,
    and small enough that large batches give >=2 grid steps (v7x megacore)."""
    b16 = _round_up(max(batch, 1), 16)
    half = _round_up(pl.cdiv(b16, 2), 16)
    return int(min(MAX_TILE_B, max(16, half)))


def _leaky_relu(v):
    # max(v, a*v) == leaky_relu(v) for 0 < a < 1 (single mul+max, no select).
    return jnp.maximum(v, NEG_SLOPE * v)


def mlp_kernel(x_ref,
               w1_ref, b1_ref,
               w2_ref, b2_ref,
               w3_ref, b3_ref,
               w4_ref, b4_ref,
               w5_ref, b5_ref,
               o_ref):
    """One batch tile through all 5 layers: 5 MXU matmuls + f32 VPU epilogues."""
    # In-kernel f32 -> bf16 cast; Mosaic lane-pads 784 -> 896 in VMEM for free.
    h = x_ref[...].astype(jnp.bfloat16)

    def layer(h_in, w_ref, b_ref, last=False):
        y = jnp.dot(h_in, w_ref[...], preferred_element_type=jnp.float32)
        y = y + b_ref[...]                               # f32 bias add (VPU)
        if last:
            return y.astype(jnp.bfloat16)                # bf16 logits (halved writeback)
        return _leaky_relu(y).astype(jnp.bfloat16)

    h = layer(h, w1_ref, b1_ref)
    h = layer(h, w2_ref, b2_ref)
    h = layer(h, w3_ref, b3_ref)
    h = layer(h, w4_ref, b4_ref)
    o_ref[...] = layer(h, w5_ref, b5_ref, last=True)     # bf16 (TILE_B, OUT_PAD)


def init_params(key):
    """PyTorch-Linear-style init; weights stored transposed as (in, out), f32."""
    params = []
    for fan_in, fan_out in zip(LAYER_SIZES[:-1], LAYER_SIZES[1:]):
        kw, kb, key = jax.random.split(key, 3)
        bound = 1.0 / jnp.sqrt(jnp.float32(fan_in))
        w = jax.random.uniform(kw, (fan_in, fan_out), jnp.float32, -bound, bound)
        b = jax.random.uniform(kb, (1, fan_out), jnp.float32, -bound, bound)
        params.append((w, b))
    return params


def prepare_params(params):
    """One-time zero-padding + bf16 cast of the weights (biases stay f32)."""
    prepared = []
    for i, (w, b) in enumerate(params):
        fan_in, fan_out = w.shape
        pin, pout = PADDED_DIMS[i]
        w_p = jnp.zeros((pin, pout), jnp.float32).at[:fan_in, :fan_out].set(w)
        b_p = jnp.zeros((1, pout), jnp.float32).at[:, :fan_out].set(b)
        prepared.append((w_p.astype(jnp.bfloat16), b_p))
    return prepared


def net_forward(x, prepared_params):
    """x: any shape with trailing elements a multiple of 784 (e.g. (B,1,28,28))."""
    x2d = x.reshape(-1, LAYER_SIZES[0]).astype(jnp.float32)
    batch = x2d.shape[0]

    tile_b = _choose_tile_b(batch)
    b_pad = _round_up(batch, tile_b)
    if b_pad != batch:
        x_in = jnp.zeros((b_pad, LAYER_SIZES[0]), jnp.float32).at[:batch].set(x2d)
    else:
        x_in = x2d                       # no wrapper-side copy when already aligned

    flat_params = []
    for w, b in prepared_params:
        flat_params.extend([w, b])

    grid = (b_pad // tile_b,)

    # Weights/biases are pinned (same block every grid step -> stay VMEM-resident,
    # no per-step re-DMA); x / output tiles stream and are double-buffered.
    in_specs = [pl.BlockSpec((tile_b, LAYER_SIZES[0]), lambda i: (i, 0))]
    for p in flat_params:
        in_specs.append(pl.BlockSpec(p.shape, lambda i: (0, 0)))
    out_specs = pl.BlockSpec((tile_b, OUT_PAD), lambda i: (i, 0))

    # Cost hint for the XLA scheduler.
    flops = 2 * b_pad * sum(pi * po for pi, po in PADDED_DIMS)
    weight_bytes = sum(w.size * 2 + b.size * 4 for w, b in prepared_params)
    bytes_accessed = weight_bytes + x_in.size * 4 + b_pad * OUT_PAD * 2
    cost = pl.CostEstimate(flops=flops, transcendentals=0,
                           bytes_accessed=bytes_accessed)

    out = pl.pallas_call(
        mlp_kernel,
        out_shape=jax.ShapeDtypeStruct((b_pad, OUT_PAD), jnp.bfloat16),
        grid=grid,
        in_specs=in_specs,
        out_specs=out_specs,
        compiler_params=pltpu.CompilerParams(
            dimension_semantics=("parallel",),
            vmem_limit_bytes=32 * 1024 * 1024),
        cost_estimate=cost,
    )(x_in, *flat_params)

    # Strip batch padding and the lane padding of the final layer; return f32 logits.
    return out[:batch, :LAYER_SIZES[-1]].astype(jnp.float32)


def net_forward_ref(x, params):
    """Pure-JAX reference using the same bf16-matmul / f32-epilogue recipe."""
    h = x.reshape(-1, LAYER_SIZES[0]).astype(jnp.bfloat16)
    for i, (w, b) in enumerate(params):
        y = jnp.dot(h, w.astype(jnp.bfloat16),
                    preferred_element_type=jnp.float32) + b
        if i < len(params) - 1:
            h = _leaky_relu(y).astype(jnp.bfloat16)
        else:
            h = y
    return h


if __name__ == "__main__":
    key = jax.random.PRNGKey(0)
    kx, kp = jax.random.split(key)

    # Small MNIST-like batch: (B, 1, 28, 28) NCHW -> view(-1, 784)
    x = jax.random.normal(kx, (8, 1, 28, 28), jnp.float32)
    params = init_params(kp)
    prepared = prepare_params(params)

    out = net_forward(x, prepared)
    out = jax.block_until_ready(out)

    ref = net_forward_ref(x, params)
    # Kernel stores bf16 logits; apply the same final rounding to the reference.
    ref = ref.astype(jnp.bfloat16).astype(jnp.float32)

    assert out.shape == (8, 10), out.shape
    assert jnp.allclose(out, ref, atol=1e-2, rtol=1e-2), "mismatch vs reference"

    print("KERNEL_OK")
</pallas_src>

<mosaic_0001>
module attributes {stable_mosaic.version = 11 : i64} {
  func.func @mlp_kernel(%arg0: i32, %arg1: memref<16x784xf32, #tpu.memory_space<vmem>>, %arg2: memref<784x512xbf16, #tpu.memory_space<vmem>>, %arg3: memref<1x512xf32, #tpu.memory_space<vmem>>, %arg4: memref<512x256xbf16, #tpu.memory_space<vmem>>, %arg5: memref<1x256xf32, #tpu.memory_space<vmem>>, %arg6: memref<256x128xbf16, #tpu.memory_space<vmem>>, %arg7: memref<1x128xf32, #tpu.memory_space<vmem>>, %arg8: memref<128x128xbf16, #tpu.memory_space<vmem>>, %arg9: memref<1x128xf32, #tpu.memory_space<vmem>>, %arg10: memref<128x128xbf16, #tpu.memory_space<vmem>>, %arg11: memref<1x128xf32, #tpu.memory_space<vmem>>, %arg12: memref<16x128xbf16, #tpu.memory_space<vmem>>) attributes {dimension_semantics = [#tpu.dimension_semantics<parallel>], iteration_bounds = array<i64: 1>, scalar_prefetch = 0 : i64, scratch_operands = 0 : i64, tpu.core_type = #tpu.core_type<tc>, window_params = [{transform_indices = @transform_0, window_bounds = array<i64: 16, 784>}, {pipeline_mode = #tpu.pipeline_mode<synchronous>, transform_indices = @transform_1, window_bounds = array<i64: 784, 512>}, {pipeline_mode = #tpu.pipeline_mode<synchronous>, transform_indices = @transform_2, window_bounds = array<i64: 1, 512>}, {pipeline_mode = #tpu.pipeline_mode<synchronous>, transform_indices = @transform_3, window_bounds = array<i64: 512, 256>}, {pipeline_mode = #tpu.pipeline_mode<synchronous>, transform_indices = @transform_4, window_bounds = array<i64: 1, 256>}, {pipeline_mode = #tpu.pipeline_mode<synchronous>, transform_indices = @transform_5, window_bounds = array<i64: 256, 128>}, {pipeline_mode = #tpu.pipeline_mode<synchronous>, transform_indices = @transform_6, window_bounds = array<i64: 1, 128>}, {pipeline_mode = #tpu.pipeline_mode<synchronous>, transform_indices = @transform_7, window_bounds = array<i64: 128, 128>}, {pipeline_mode = #tpu.pipeline_mode<synchronous>, transform_indices = @transform_8, window_bounds = array<i64: 1, 128>}, {pipeline_mode = #tpu.pipeline_mode<synchronous>, transform_indices = @transform_9, window_bounds = array<i64: 128, 128>}, {pipeline_mode = #tpu.pipeline_mode<synchronous>, transform_indices = @transform_10, window_bounds = array<i64: 1, 128>}, {transform_indices = @transform_11, window_bounds = array<i64: 16, 128>}]} {
    %c0 = arith.constant 0 : index
    %c0_0 = arith.constant 0 : index
    %0 = vector.load %arg1[%c0, %c0_0] : memref<16x784xf32, #tpu.memory_space<vmem>>, vector<16x784xf32>
    %1 = arith.truncf %0 : vector<16x784xf32> to vector<16x784xbf16>
    %c0_1 = arith.constant 0 : index
    %c0_2 = arith.constant 0 : index
    %2 = vector.load %arg2[%c0_1, %c0_2] : memref<784x512xbf16, #tpu.memory_space<vmem>>, vector<784x512xbf16>
    %cst = arith.constant dense<0.000000e+00> : vector<16x512xf32>
    %3 = tpu.matmul %1, %2, %cst {dimension_numbers = #tpu.dot_dimension_numbers<[1], [0], [0], [1], [0, 0, 1, 1], [], []>} : vector<16x784xbf16>, vector<784x512xbf16>, vector<16x512xf32> -> vector<16x512xf32>
    %c0_3 = arith.constant 0 : index
    %c0_4 = arith.constant 0 : index
    %4 = vector.load %arg3[%c0_3, %c0_4] : memref<1x512xf32, #tpu.memory_space<vmem>>, vector<1x512xf32>
    %5 = vector.broadcast %4 : vector<1x512xf32> to vector<16x512xf32>
    %6 = arith.addf %3, %5 : vector<16x512xf32>
    %cst_5 = arith.constant 0.00999999977 : f32
    %7 = vector.broadcast %cst_5 : f32 to vector<16x512xf32>
    %8 = arith.mulf %7, %6 : vector<16x512xf32>
    %9 = arith.maximumf %6, %8 : vector<16x512xf32>
    %10 = arith.truncf %9 : vector<16x512xf32> to vector<16x512xbf16>
    %c0_6 = arith.constant 0 : index
    %c0_7 = arith.constant 0 : index
    %11 = vector.load %arg4[%c0_6, %c0_7] : memref<512x256xbf16, #tpu.memory_space<vmem>>, vector<512x256xbf16>
    %cst_8 = arith.constant dense<0.000000e+00> : vector<16x256xf32>
    %12 = tpu.matmul %10, %11, %cst_8 {dimension_numbers = #tpu.dot_dimension_numbers<[1], [0], [0], [1], [0, 0, 1, 1], [], []>} : vector<16x512xbf16>, vector<512x256xbf16>, vector<16x256xf32> -> vector<16x256xf32>
    %c0_9 = arith.constant 0 : index
    %c0_10 = arith.constant 0 : index
    %13 = vector.load %arg5[%c0_9, %c0_10] : memref<1x256xf32, #tpu.memory_space<vmem>>, vector<1x256xf32>
    %14 = vector.broadcast %13 : vector<1x256xf32> to vector<16x256xf32>
    %15 = arith.addf %12, %14 : vector<16x256xf32>
    %cst_11 = arith.constant 0.00999999977 : f32
    %16 = vector.broadcast %cst_11 : f32 to vector<16x256xf32>
    %17 = arith.mulf %16, %15 : vector<16x256xf32>
    %18 = arith.maximumf %15, %17 : vector<16x256xf32>
    %19 = arith.truncf %18 : vector<16x256xf32> to vector<16x256xbf16>
    %c0_12 = arith.constant 0 : index
    %c0_13 = arith.constant 0 : index
    %20 = vector.load %arg6[%c0_12, %c0_13] : memref<256x128xbf16, #tpu.memory_space<vmem>>, vector<256x128xbf16>
    %cst_14 = arith.constant dense<0.000000e+00> : vector<16x128xf32>
    %21 = tpu.matmul %19, %20, %cst_14 {dimension_numbers = #tpu.dot_dimension_numbers<[1], [0], [0], [1], [0, 0, 1, 1], [], []>} : vector<16x256xbf16>, vector<256x128xbf16>, vector<16x128xf32> -> vector<16x128xf32>
    %c0_15 = arith.constant 0 : index
    %c0_16 = arith.constant 0 : index
    %22 = vector.load %arg7[%c0_15, %c0_16] : memref<1x128xf32, #tpu.memory_space<vmem>>, vector<1x128xf32>
    %23 = vector.broadcast %22 : vector<1x128xf32> to vector<16x128xf32>
    %24 = arith.addf %21, %23 : vector<16x128xf32>
    %cst_17 = arith.constant 0.00999999977 : f32
    %25 = vector.broadcast %cst_17 : f32 to vector<16x128xf32>
    %26 = arith.mulf %25, %24 : vector<16x128xf32>
    %27 = arith.maximumf %24, %26 : vector<16x128xf32>
    %28 = arith.truncf %27 : vector<16x128xf32> to vector<16x128xbf16>
    %c0_18 = arith.constant 0 : index
    %c0_19 = arith.constant 0 : index
    %29 = vector.load %arg8[%c0_18, %c0_19] : memref<128x128xbf16, #tpu.memory_space<vmem>>, vector<128x128xbf16>
    %cst_20 = arith.constant dense<0.000000e+00> : vector<16x128xf32>
    %30 = tpu.matmul %28, %29, %cst_20 {dimension_numbers = #tpu.dot_dimension_numbers<[1], [0], [0], [1], [0, 0, 1, 1], [], []>} : vector<16x128xbf16>, vector<128x128xbf16>, vector<16x128xf32> -> vector<16x128xf32>
    %c0_21 = arith.constant 0 : index
    %c0_22 = arith.constant 0 : index
    %31 = vector.load %arg9[%c0_21, %c0_22] : memref<1x128xf32, #tpu.memory_space<vmem>>, vector<1x128xf32>
    %32 = vector.broadcast %31 : vector<1x128xf32> to vector<16x128xf32>
    %33 = arith.addf %30, %32 : vector<16x128xf32>
    %cst_23 = arith.constant 0.00999999977 : f32
    %34 = vector.broadcast %cst_23 : f32 to vector<16x128xf32>
    %35 = arith.mulf %34, %33 : vector<16x128xf32>
    %36 = arith.maximumf %33, %35 : vector<16x128xf32>
    %37 = arith.truncf %36 : vector<16x128xf32> to vector<16x128xbf16>
    %c0_24 = arith.constant 0 : index
    %c0_25 = arith.constant 0 : index
    %38 = vector.load %arg10[%c0_24, %c0_25] : memref<128x128xbf16, #tpu.memory_space<vmem>>, vector<128x128xbf16>
    %cst_26 = arith.constant dense<0.000000e+00> : vector<16x128xf32>
    %39 = tpu.matmul %37, %38, %cst_26 {dimension_numbers = #tpu.dot_dimension_numbers<[1], [0], [0], [1], [0, 0, 1, 1], [], []>} : vector<16x128xbf16>, vector<128x128xbf16>, vector<16x128xf32> -> vector<16x128xf32>
    %c0_27 = arith.constant 0 : index
    %c0_28 = arith.constant 0 : index
    %40 = vector.load %arg11[%c0_27, %c0_28] : memref<1x128xf32, #tpu.memory_space<vmem>>, vector<1x128xf32>
    %41 = vector.broadcast %40 : vector<1x128xf32> to vector<16x128xf32>
    %42 = arith.addf %39, %41 : vector<16x128xf32>
    %43 = arith.truncf %42 : vector<16x128xf32> to vector<16x128xbf16>
    %c0_29 = arith.constant 0 : index
    %c0_30 = arith.constant 0 : index
    %44 = vector.load %arg12[%c0_29, %c0_30] : memref<16x128xbf16, #tpu.memory_space<vmem>>, vector<16x128xbf16>
    tpu.vector_store %arg12[%c0_29, %c0_30], %43 {strides = array<i32>} : memref<16x128xbf16, #tpu.memory_space<vmem>>, vector<16x128xbf16>,
    return
  }
  func.func @transform_0(%arg0: i32) -> (i32, i32) {
    %c0_i32 = arith.constant 0 : i32
    %c0_i32_0 = arith.constant 0 : i32
    return %arg0, %c0_i32 : i32, i32
  }
  func.func @transform_1(%arg0: i32) -> (i32, i32) {
    %c0_i32 = arith.constant 0 : i32
    %c0_i32_0 = arith.constant 0 : i32
    %c0_i32_1 = arith.constant 0 : i32
    return %c0_i32, %c0_i32_0 : i32, i32
  }
  func.func @transform_2(%arg0: i32) -> (i32, i32) {
    %c0_i32 = arith.constant 0 : i32
    %c0_i32_0 = arith.constant 0 : i32
    %c0_i32_1 = arith.constant 0 : i32
    return %c0_i32, %c0_i32_0 : i32, i32
  }
  func.func @transform_3(%arg0: i32) -> (i32, i32) {
    %c0_i32 = arith.constant 0 : i32
    %c0_i32_0 = arith.constant 0 : i32
    %c0_i32_1 = arith.constant 0 : i32
    return %c0_i32, %c0_i32_0 : i32, i32
  }
  func.func @transform_4(%arg0: i32) -> (i32, i32) {
    %c0_i32 = arith.constant 0 : i32
    %c0_i32_0 = arith.constant 0 : i32
    %c0_i32_1 = arith.constant 0 : i32
    return %c0_i32, %c0_i32_0 : i32, i32
  }
  func.func @transform_5(%arg0: i32) -> (i32, i32) {
    %c0_i32 = arith.constant 0 : i32
    %c0_i32_0 = arith.constant 0 : i32
    %c0_i32_1 = arith.constant 0 : i32
    return %c0_i32, %c0_i32_0 : i32, i32
  }
  func.func @transform_6(%arg0: i32) -> (i32, i32) {
    %c0_i32 = arith.constant 0 : i32
    %c0_i32_0 = arith.constant 0 : i32
    %c0_i32_1 = arith.constant 0 : i32
    return %c0_i32, %c0_i32_0 : i32, i32
  }
  func.func @transform_7(%arg0: i32) -> (i32, i32) {
    %c0_i32 = arith.constant 0 : i32
    %c0_i32_0 = arith.constant 0 : i32
    %c0_i32_1 = arith.constant 0 : i32
    return %c0_i32, %c0_i32_0 : i32, i32
  }
  func.func @transform_8(%arg0: i32) -> (i32, i32) {
    %c0_i32 = arith.constant 0 : i32
    %c0_i32_0 = arith.constant 0 : i32
    %c0_i32_1 = arith.constant 0 : i32
    return %c0_i32, %c0_i32_0 : i32, i32
  }
  func.func @transform_9(%arg0: i32) -> (i32, i32) {
    %c0_i32 = arith.constant 0 : i32
    %c0_i32_0 = arith.constant 0 : i32
    %c0_i32_1 = arith.constant 0 : i32
    return %c0_i32, %c0_i32_0 : i32, i32
  }
  func.func @transform_10(%arg0: i32) -> (i32, i32) {
    %c0_i32 = arith.constant 0 : i32
    %c0_i32_0 = arith.constant 0 : i32
    %c0_i32_1 = arith.constant 0 : i32
    return %c0_i32, %c0_i32_0 : i32, i32
  }
  func.func @transform_11(%arg0: i32) -> (i32, i32) {
    %c0_i32 = arith.constant 0 : i32
    %c0_i32_0 = arith.constant 0 : i32
    return %arg0, %c0_i32 : i32, i32
  }
}

</mosaic_0001>

<llo_original>
// kernel: tpu_custom_call.1
$region0: #{tpu_custom_call.1}
  #allocation0 [shape = 'u32[]', space=smem, size = 0x4, offset = 0x4, fixed_abs, tag = 'smem constant byte address 0x4 - core index']
  #allocation1 [shape = 'u32[144,128]{1,0:T(1,128)}', space=vmem, size = 0x12000, scoped, tag = 'internal scratch']
  %s0 = inlined_call_operand.hbm [shape: f32[16,784], index: 0, kind: input, shape index: {}]
  %s1 = inlined_call_operand.hbm [shape: bf16[784,512], index: 1, kind: input, shape index: {}]
  %s2 = inlined_call_operand.hbm [shape: f32[1,512], index: 2, kind: input, shape index: {}]
  %s3 = inlined_call_operand.hbm [shape: bf16[512,256], index: 3, kind: input, shape index: {}]
  %s4 = inlined_call_operand.vmem [shape: f32[1,256], index: 4, kind: input, shape index: {}]
  %s5 = inlined_call_operand.hbm [shape: bf16[256,128], index: 5, kind: input, shape index: {}]
  %s6 = inlined_call_operand.vmem [shape: f32[1,128], index: 6, kind: input, shape index: {}]
  %s7 = inlined_call_operand.hbm [shape: bf16[128,128], index: 7, kind: input, shape index: {}]
  %s8 = inlined_call_operand.vmem [shape: f32[1,128], index: 8, kind: input, shape index: {}]
  %s9 = inlined_call_operand.hbm [shape: bf16[128,128], index: 9, kind: input, shape index: {}]
  %s10 = inlined_call_operand.vmem [shape: f32[1,128], index: 10, kind: input, shape index: {}]
  %s11 = inlined_call_operand.hbm [shape: bf16[16,128], index: 11, kind: output, shape index: {}]
  %s12 = sld [smem:[#allocation0]]
  $region82: #{tpu_custom_call.1} parent=0
    _
  %s14 = ssub.s32 1, %s12
  %s15 = scalar_select 0, %s14, %s12
  $region1: #{tpu_custom_call.1} parent=0
    #allocation2 [shape = 'u8[57344]{0}', space=vmem, size = 0xe000, scoped, tag = 'input window, operand 0, single buffered']
    #allocation3 [shape = 's32[1]{0}', space=sflag, size = 0x4, scoped, tag = 'scoped memory for tpu_custom_call.1']
    #allocation4 [shape = 's32[1]{0}', space=sflag, size = 0x4, scoped, tag = 'scoped memory for tpu_custom_call.1']
    #allocation5 [shape = 'u8[802816]{0}', space=vmem, size = 0xc4000, scoped, tag = 'input window, operand 1, single buffered']
    #allocation6 [shape = 's32[1]{0}', space=sflag, size = 0x4, scoped, tag = 'scoped memory for tpu_custom_call.1']
    #allocation7 [shape = 'u8[2048]{0}', space=vmem, size = 0x800, scoped, tag = 'input window, operand 2, single buffered']
    #allocation8 [shape = 'u8[262144]{0}', space=vmem, size = 0x40000, scoped, tag = 'input window, operand 3, single buffered']
    #allocation9 [shape = 's32[1]{0}', space=sflag, size = 0x4, scoped, tag = 'scoped memory for tpu_custom_call.1']
    #allocation10 [shape = 'u8[65536]{0}', space=vmem, size = 0x10000, scoped, tag = 'input window, operand 5, single buffered']
    #allocation11 [shape = 'u8[32768]{0}', space=vmem, size = 0x8000, scoped, tag = 'input window, operand 7, single buffered']
    #allocation12 [shape = 's32[1]{0}', space=sflag, size = 0x4, scoped, tag = 'scoped memory for tpu_custom_call.1']
    #allocation13 [shape = 'u8[32768]{0}', space=vmem, size = 0x8000, scoped, tag = 'input window, operand 9, single buffered']
    #allocation14 [shape = 'u8[4096]{0}', space=vmem, size = 0x1000, scoped, tag = 'output window, operand 0, single buffered']
    %16 = vsyncpa [#allocation3], 0
    %17 = vsyncpa [#allocation6], 0
    %18 = vsyncpa [#allocation9], 0
    %19 = vsyncpa [#allocation12], 0
    %20 = vsyncpa [#allocation4], 0
    // Predicated region
    $region2: #{tpu_custom_call.1} parent=1 // pred_check
      _
    $region3: #{tpu_custom_call.1} parent=1 // pred_check_branch
      %22 = sbr.rel (0) target = $region5
    $region4: #{tpu_custom_call.1} parent=1 // pred_region
      %s24 = ssub.s32 1792, 1792
      %25 = vsyncadd [#allocation3], %s24
      %s26 = sshll.u32 [#allocation2], 4
      %s27 = int_to_ptr.vmem [resolvable:$true] %s26
      %32 = dma.hbm_to_vmem [thread:$0]  %s0, 1792, %s27, [#allocation3], 896, 896, 56
    $region5: #{tpu_custom_call.1} parent=1 // pred_fallthru
      _
    // Predicated region
    $region6: #{tpu_custom_call.1} parent=1 // pred_check
      _
    $region7: #{tpu_custom_call.1} parent=1 // pred_check_branch
      %34 = sbr.rel (0) target = $region9
    $region8: #{tpu_custom_call.1} parent=1 // pred_region
      %s36 = ssub.s32 25088, 25088
      %37 = vsyncadd [#allocation6], %s36
      %s38 = sshll.u32 [#allocation5], 4
      %s39 = int_to_ptr.vmem [resolvable:$true] %s38
      %44 = dma.hbm_to_vmem [thread:$0]  %s1, 25088, %s39, [#allocation6], 256, 256, 16
    $region9: #{tpu_custom_call.1} parent=1 // pred_fallthru
      _
    // Predicated region
    $region10: #{tpu_custom_call.1} parent=1 // pred_check
      _
    $region11: #{tpu_custom_call.1} parent=1 // pred_check_branch
      %46 = sbr.rel (0) target = $region13
    $region12: #{tpu_custom_call.1} parent=1 // pred_region
      %s48 = ssub.s32 64, 64
      %49 = vsyncadd [#allocation6], %s48
      %s51 = sshll.u32 [#allocation7], 4
      %s52 = int_to_ptr.vmem [resolvable:$true] %s51
      %54 = dma.hbm_to_vmem [thread:$0]  %s2, 64, %s52, [#allocation6]
    $region13: #{tpu_custom_call.1} parent=1 // pred_fallthru
      _
    // Predicated region
    $region14: #{tpu_custom_call.1} parent=1 // pred_check
      _
    $region15: #{tpu_custom_call.1} parent=1 // pred_check_branch
      %56 = sbr.rel (0) target = $region17
    $region16: #{tpu_custom_call.1} parent=1 // pred_region
      %s58 = ssub.s32 8192, 8192
      %59 = vsyncadd [#allocation9], %s58
      %s60 = sshll.u32 [#allocation8], 4
      %s61 = int_to_ptr.vmem [resolvable:$true] %s60
      %66 = dma.hbm_to_vmem [thread:$0]  %s3, 8192, %s61, [#allocation9], 128, 128, 8
    $region17: #{tpu_custom_call.1} parent=1 // pred_fallthru
      _
    // Predicated region
    $region18: #{tpu_custom_call.1} parent=1 // pred_check
      _
    $region19: #{tpu_custom_call.1} parent=1 // pred_check_branch
      %68 = sbr.rel (0) target = $region21
    $region20: #{tpu_custom_call.1} parent=1 // pred_region
      _
    $region21: #{tpu_custom_call.1} parent=1 // pred_fallthru
      _
    // Predicated region
    $region22: #{tpu_custom_call.1} parent=1 // pred_check
      _
    $region23: #{tpu_custom_call.1} parent=1 // pred_check_branch
      %70 = sbr.rel (0) target = $region25
    $region24: #{tpu_custom_call.1} parent=1 // pred_region
      %s72 = ssub.s32 2048, 2048
      %73 = vsyncadd [#allocation9], %s72
      %s74 = sshll.u32 [#allocation10], 4
      %s75 = int_to_ptr.vmem [resolvable:$true] %s74
      %80 = dma.hbm_to_vmem [thread:$0]  %s5, 2048, %s75, [#allocation9], 64, 64, 4
    $region25: #{tpu_custom_call.1} parent=1 // pred_fallthru
      _
    // Predicated region
    $region26: #{tpu_custom_call.1} parent=1 // pred_check
      _
    $region27: #{tpu_custom_call.1} parent=1 // pred_check_branch
      %82 = sbr.rel (0) target = $region29
    $region28: #{tpu_custom_call.1} parent=1 // pred_region
      _
    $region29: #{tpu_custom_call.1} parent=1 // pred_fallthru
      _
    // Predicated region
    $region30: #{tpu_custom_call.1} parent=1 // pred_check
      _
    $region31: #{tpu_custom_call.1} parent=1 // pred_check_branch
      %84 = sbr.rel (0) target = $region33
    $region32: #{tpu_custom_call.1} parent=1 // pred_region
      %s86 = ssub.s32 1024, 1024
      %87 = vsyncadd [#allocation12], %s86
      %s88 = sshll.u32 [#allocation11], 4
      %s89 = int_to_ptr.vmem [resolvable:$true] %s88
      %94 = dma.hbm_to_vmem [thread:$0]  %s7, 1024, %s89, [#allocation12], 64, 64, 4
    $region33: #{tpu_custom_call.1} parent=1 // pred_fallthru
      _
    // Predicated region
    $region34: #{tpu_custom_call.1} parent=1 // pred_check
      _
    $region35: #{tpu_custom_call.1} parent=1 // pred_check_branch
      %96 = sbr.rel (0) target = $region37
    $region36: #{tpu_custom_call.1} parent=1 // pred_region
      _
    $region37: #{tpu_custom_call.1} parent=1 // pred_fallthru
      _
    // Predicated region
    $region38: #{tpu_custom_call.1} parent=1 // pred_check
      _
    $region39: #{tpu_custom_call.1} parent=1 // pred_check_branch
      %98 = sbr.rel (0) target = $region41
    $region40: #{tpu_custom_call.1} parent=1 // pred_region
      %s100 = ssub.s32 1024, 1024
      %101 = vsyncadd [#allocation12], %s100
      %s102 = sshll.u32 [#allocation13], 4
      %s103 = int_to_ptr.vmem [resolvable:$true] %s102
      %108 = dma.hbm_to_vmem [thread:$0]  %s9, 1024, %s103, [#allocation12], 64, 64, 4
    $region41: #{tpu_custom_call.1} parent=1 // pred_fallthru
      _
    // Predicated region
    $region42: #{tpu_custom_call.1} parent=1 // pred_check
      _
    $region43: #{tpu_custom_call.1} parent=1 // pred_check_branch
      %110 = sbr.rel (0) target = $region45
    $region44: #{tpu_custom_call.1} parent=1 // pred_region
      _
    $region45: #{tpu_custom_call.1} parent=1 // pred_fallthru
      _
    // Predicated region
    $region46: #{tpu_custom_call.1} parent=1 // pred_check
      _
    $region47: #{tpu_custom_call.1} parent=1 // pred_check_branch
      %112 = sbr.rel (0) target = $region49
    $region48: #{tpu_custom_call.1} parent=1 // pred_region
      %113 = dma.done [#allocation3], 1792
    $region49: #{tpu_custom_call.1} parent=1 // pred_fallthru
      _
    // Predicated region
    $region50: #{tpu_custom_call.1} parent=1 // pred_check
      _
    $region51: #{tpu_custom_call.1} parent=1 // pred_check_branch
      %115 = sbr.rel (0) target = $region53
    $region52: #{tpu_custom_call.1} parent=1 // pred_region
      %116 = dma.done [#allocation6], 25088
    $region53: #{tpu_custom_call.1} parent=1 // pred_fallthru
      _
    // Predicated region
    $region54: #{tpu_custom_call.1} parent=1 // pred_check
      _
    $region55: #{tpu_custom_call.1} parent=1 // pred_check_branch
      %118 = sbr.rel (0) target = $region57
    $region56: #{tpu_custom_call.1} parent=1 // pred_region
      %119 = dma.done [#allocation6], 64
    $region57: #{tpu_custom_call.1} parent=1 // pred_fallthru
      _
    // Predicated region
    $region58: #{tpu_custom_call.1} parent=1 // pred_check
      _
    $region59: #{tpu_custom_call.1} parent=1 // pred_check_branch
      %121 = sbr.rel (0) target = $region61
    $region60: #{tpu_custom_call.1} parent=1 // pred_region
      %122 = dma.done [#allocation9], 8192
    $region61: #{tpu_custom_call.1} parent=1 // pred_fallthru
      _
    // Predicated region
    $region62: #{tpu_custom_call.1} parent=1 // pred_check
      _
    $region63: #{tpu_custom_call.1} parent=1 // pred_check_branch
      %124 = sbr.rel (0) target = $region65
    $region64: #{tpu_custom_call.1} parent=1 // pred_region
      %125 = dma.done [#allocation9], 2048
    $region65: #{tpu_custom_call.1} parent=1 // pred_fallthru
      _
    // Predicated region
    $region66: #{tpu_custom_call.1} parent=1 // pred_check
      _
    $region67: #{tpu_custom_call.1} parent=1 // pred_check_branch
      %127 = sbr.rel (0) target = $region69
    $region68: #{tpu_custom_call.1} parent=1 // pred_region
      %128 = dma.done [#allocation12], 1024
    $region69: #{tpu_custom_call.1} parent=1 // pred_fallthru
      _
    // Predicated region
    $region70: #{tpu_custom_call.1} parent=1 // pred_check
      _
    $region71: #{tpu_custom_call.1} parent=1 // pred_check_branch
      %130 = sbr.rel (0) target = $region73
    $region72: #{tpu_custom_call.1} parent=1 // pred_region
      %131 = dma.done [#allocation12], 1024
    $region73: #{tpu_custom_call.1} parent=1 // pred_fallthru
      _
    %v133 = vld [vmem:[#allocation2] sm:$0xff]
    %v134 = vld [vmem:[#allocation2 + $0x8] sm:$0xff]
    %v135 = vld [vmem:[#allocation2 + $0x10] sm:$0xff]
    %v136 = vld [vmem:[#allocation2 + $0x18] sm:$0xff]
    %v137 = vld [vmem:[#allocation2 + $0x20] sm:$0xff]
    %v138 = vld [vmem:[#allocation2 + $0x28] sm:$0xff]
    %v139 = vld [vmem:[#allocation2 + $0x30] sm:$0xff]
    %v140 = vld [vmem:[#allocation2 + $0x38] sm:$0xff]
    %v141 = vld [vmem:[#allocation2 + $0x40] sm:$0xff]
    %v142 = vld [vmem:[#allocation2 + $0x48] sm:$0xff]
    %v143 = vld [vmem:[#allocation2 + $0x50] sm:$0xff]
    %v144 = vld [vmem:[#allocation2 + $0x58] sm:$0xff]
    %v145 = vld [vmem:[#allocation2 + $0x60] sm:$0xff]
    %v146 = vld [vmem:[#allocation2 + $0x68] sm:$0xff]
    %v147 = vpack.c.bf16 %v140, %v133
    %v148 = vpack.c.bf16 %v141, %v134
    %v149 = vpack.c.bf16 %v142, %v135
    %v150 = vpack.c.bf16 %v143, %v136
    %v151 = vpack.c.bf16 %v144, %v137
    %v152 = vpack.c.bf16 %v145, %v138
    %v153 = vpack.c.bf16 %v146, %v139
    %v154 = vld [vmem:[#allocation5] sm:$0xff]
    %v155 = vld [vmem:[#allocation5 + $0x8] sm:$0xff]
    %v156 = vld [vmem:[#allocation5 + $0x10] sm:$0xff]
    %v157 = vld [vmem:[#allocation5 + $0x18] sm:$0xff]
    %v158 = vld [vmem:[#allocation5 + $0x20] sm:$0xff]
    %v159 = vld [vmem:[#allocation5 + $0x28] sm:$0xff]
    %v160 = vld [vmem:[#allocation5 + $0x30] sm:$0xff]
    %v161 = vld [vmem:[#allocation5 + $0x38] sm:$0xff]
    %v162 = vld [vmem:[#allocation5 + $0x40] sm:$0xff]
    %v163 = vld [vmem:[#allocation5 + $0x48] sm:$0xff]
    %v164 = vld [vmem:[#allocation5 + $0x50] sm:$0xff]
    %v165 = vld [vmem:[#allocation5 + $0x58] sm:$0xff]
    %v166 = vld [vmem:[#allocation5 + $0x60] sm:$0xff]
    %v167 = vld [vmem:[#allocation5 + $0x68] sm:$0xff]
    %v168 = vld [vmem:[#allocation5 + $0x70] sm:$0xff]
    %v169 = vld [vmem:[#allocation5 + $0x78] sm:$0xff]
    %v170 = vld [vmem:[#allocation5 + $0x80] sm:$0xff]
    %v171 = vld [vmem:[#allocation5 + $0x88] sm:$0xff]
    %v172 = vld [vmem:[#allocation5 + $0x90] sm:$0xff]
    %v173 = vld [vmem:[#allocation5 + $0x98] sm:$0xff]
    %v174 = vld [vmem:[#allocation5 + $0xa0] sm:$0xff]
    %v175 = vld [vmem:[#allocation5 + $0xa8] sm:$0xff]
    %v176 = vld [vmem:[#allocation5 + $0xb0] sm:$0xff]
    %v177 = vld [vmem:[#allocation5 + $0xb8] sm:$0xff]
    %v178 = vld [vmem:[#allocation5 + $0xc0] sm:$0xff]
    %v179 = vld [vmem:[#allocation5 + $0xc8] sm:$0xff]
    %v180 = vld [vmem:[#allocation5 + $0xd0] sm:$0xff]
    %v181 = vld [vmem:[#allocation5 + $0xd8] sm:$0xff]
    %v182 = vld [vmem:[#allocation5 + $0xe0] sm:$0xff]
    %v183 = vld [vmem:[#allocation5 + $0xe8] sm:$0xff]
    %v184 = vld [vmem:[#allocation5 + $0xf0] sm:$0xff]
    %v185 = vld [vmem:[#allocation5 + $0xf8] sm:$0xff]
    %v186 = vld [vmem:[#allocation5 + $0x100] sm:$0xff]
    %v187 = vld [vmem:[#allocation5 + $0x108] sm:$0xff]
    %v188 = vld [vmem:[#allocation5 + $0x110] sm:$0xff]
    %v189 = vld [vmem:[#allocation5 + $0x118] sm:$0xff]
    %v190 = vld [vmem:[#allocation5 + $0x120] sm:$0xff]
    %v191 = vld [vmem:[#allocation5 + $0x128] sm:$0xff]
    %v192 = vld [vmem:[#allocation5 + $0x130] sm:$0xff]
    %v193 = vld [vmem:[#allocation5 + $0x138] sm:$0xff]
    %v194 = vld [vmem:[#allocation5 + $0x140] sm:$0xff]
    %v195 = vld [vmem:[#allocation5 + $0x148] sm:$0xff]
    %v196 = vld [vmem:[#allocation5 + $0x150] sm:$0xff]
    %v197 = vld [vmem:[#allocation5 + $0x158] sm:$0xff]
    %v198 = vld [vmem:[#allocation5 + $0x160] sm:$0xff]
    %v199 = vld [vmem:[#allocation5 + $0x168] sm:$0xff]
    %v200 = vld [vmem:[#allocation5 + $0x170] sm:$0xff]
    %v201 = vld [vmem:[#allocation5 + $0x178] sm:$0xff]
    %v202 = vld [vmem:[#allocation5 + $0x180] sm:$0xff]
    %v203 = vld [vmem:[#allocation5 + $0x188] sm:$0xff]
    %v204 = vld [vmem:[#allocation5 + $0x190] sm:$0xff]
    %v205 = vld [vmem:[#allocation5 + $0x198] sm:$0xff]
    %v206 = vld [vmem:[#allocation5 + $0x1a0] sm:$0xff]
    %v207 = vld [vmem:[#allocation5 + $0x1a8] sm:$0xff]
    %v208 = vld [vmem:[#allocation5 + $0x1b0] sm:$0xff]
    %v209 = vld [vmem:[#allocation5 + $0x1b8] sm:$0xff]
    %v210 = vld [vmem:[#allocation5 + $0x1c0] sm:$0xff]
    %v211 = vld [vmem:[#allocation5 + $0x1c8] sm:$0xff]
    %v212 = vld [vmem:[#allocation5 + $0x1d0] sm:$0xff]
    %v213 = vld [vmem:[#allocation5 + $0x1d8] sm:$0xff]
    %v214 = vld [vmem:[#allocation5 + $0x1e0] sm:$0xff]
    %v215 = vld [vmem:[#allocation5 + $0x1e8] sm:$0xff]
    %v216 = vld [vmem:[#allocation5 + $0x1f0] sm:$0xff]
    %v217 = vld [vmem:[#allocation5 + $0x1f8] sm:$0xff]
    %v218 = vld [vmem:[#allocation5 + $0x200] sm:$0xff]
    %v219 = vld [vmem:[#allocation5 + $0x208] sm:$0xff]
    %v220 = vld [vmem:[#allocation5 + $0x210] sm:$0xff]
    %v221 = vld [vmem:[#allocation5 + $0x218] sm:$0xff]
    %v222 = vld [vmem:[#allocation5 + $0x220] sm:$0xff]
    %v223 = vld [vmem:[#allocation5 + $0x228] sm:$0xff]
    %v224 = vld [vmem:[#allocation5 + $0x230] sm:$0xff]
    %v225 = vld [vmem:[#allocation5 + $0x238] sm:$0xff]
    %v226 = vld [vmem:[#allocation5 + $0x240] sm:$0xff]
    %v227 = vld [vmem:[#allocation5 + $0x248] sm:$0xff]
    %v228 = vld [vmem:[#allocation5 + $0x250] sm:$0xff]
    %v229 = vld [vmem:[#allocation5 + $0x258] sm:$0xff]
    %v230 = vld [vmem:[#allocation5 + $0x260] sm:$0xff]
    %v231 = vld [vmem:[#allocation5 + $0x268] sm:$0xff]
    %v232 = vld [vmem:[#allocation5 + $0x270] sm:$0xff]
    %v233 = vld [vmem:[#allocation5 + $0x278] sm:$0xff]
    %v234 = vld [vmem:[#allocation5 + $0x280] sm:$0xff]
    %v235 = vld [vmem:[#allocation5 + $0x288] sm:$0xff]
    %v236 = vld [vmem:[#allocation5 + $0x290] sm:$0xff]
    %v237 = vld [vmem:[#allocation5 + $0x298] sm:$0xff]
    %v238 = vld [vmem:[#allocation5 + $0x2a0] sm:$0xff]
    %v239 = vld [vmem:[#allocation5 + $0x2a8] sm:$0xff]
    %v240 = vld [vmem:[#allocation5 + $0x2b0] sm:$0xff]
    %v241 = vld [vmem:[#allocation5 + $0x2b8] sm:$0xff]
    %v242 = vld [vmem:[#allocation5 + $0x2c0] sm:$0xff]
    %v243 = vld [vmem:[#allocation5 + $0x2c8] sm:$0xff]
    %v244 = vld [vmem:[#allocation5 + $0x2d0] sm:$0xff]
    %v245 = vld [vmem:[#allocation5 + $0x2d8] sm:$0xff]
    %v246 = vld [vmem:[#allocation5 + $0x2e0] sm:$0xff]
    %v247 = vld [vmem:[#allocation5 + $0x2e8] sm:$0xff]
    %v248 = vld [vmem:[#allocation5 + $0x2f0] sm:$0xff]
    %v249 = vld [vmem:[#allocation5 + $0x2f8] sm:$0xff]
    %v250 = vld [vmem:[#allocation5 + $0x300] sm:$0xff]
    %v251 = vld [vmem:[#allocation5 + $0x308] sm:$0xff]
    %v252 = vld [vmem:[#allocation5 + $0x310] sm:$0xff]
    %v253 = vld [vmem:[#allocation5 + $0x318] sm:$0xff]
    %v254 = vld [vmem:[#allocation5 + $0x320] sm:$0xff]
    %v255 = vld [vmem:[#allocation5 + $0x328] sm:$0xff]
    %v256 = vld [vmem:[#allocation5 + $0x330] sm:$0xff]
    %v257 = vld [vmem:[#allocation5 + $0x338] sm:$0xff]
    %v258 = vld [vmem:[#allocation5 + $0x340] sm:$0xff]
    %v259 = vld [vmem:[#allocation5 + $0x348] sm:$0xff]
    %v260 = vld [vmem:[#allocation5 + $0x350] sm:$0xff]
    %v261 = vld [vmem:[#allocation5 + $0x358] sm:$0xff]
    %v262 = vld [vmem:[#allocation5 + $0x360] sm:$0xff]
    %v263 = vld [vmem:[#allocation5 + $0x368] sm:$0xff]
    %v264 = vld [vmem:[#allocation5 + $0x370] sm:$0xff]
    %v265 = vld [vmem:[#allocation5 + $0x378] sm:$0xff]
    %v266 = vld [vmem:[#allocation5 + $0x380] sm:$0xff]
    %v267 = vld [vmem:[#allocation5 + $0x388] sm:$0xff]
    %v268 = vld [vmem:[#allocation5 + $0x390] sm:$0xff]
    %v269 = vld [vmem:[#allocation5 + $0x398] sm:$0xff]
    %v270 = vld [vmem:[#allocation5 + $0x3a0] sm:$0xff]
    %v271 = vld [vmem:[#allocation5 + $0x3a8] sm:$0xff]
    %v272 = vld [vmem:[#allocation5 + $0x3b0] sm:$0xff]
    %v273 = vld [vmem:[#allocation5 + $0x3b8] sm:$0xff]
    %v274 = vld [vmem:[#allocation5 + $0x3c0] sm:$0xff]
    %v275 = vld [vmem:[#allocation5 + $0x3c8] sm:$0xff]
    %v276 = vld [vmem:[#allocation5 + $0x3d0] sm:$0xff]
    %v277 = vld [vmem:[#allocation5 + $0x3d8] sm:$0xff]
    %v278 = vld [vmem:[#allocation5 + $0x3e0] sm:$0xff]
    %v279 = vld [vmem:[#allocation5 + $0x3e8] sm:$0xff]
    %v280 = vld [vmem:[#allocation5 + $0x3f0] sm:$0xff]
    %v281 = vld [vmem:[#allocation5 + $0x3f8] sm:$0xff]
    %v282 = vld [vmem:[#allocation5 + $0x400] sm:$0xff]
    %v283 = vld [vmem:[#allocation5 + $0x408] sm:$0xff]
    %v284 = vld [vmem:[#allocation5 + $0x410] sm:$0xff]
    %v285 = vld [vmem:[#allocation5 + $0x418] sm:$0xff]
    %v286 = vld [vmem:[#allocation5 + $0x420] sm:$0xff]
    %v287 = vld [vmem:[#allocation5 + $0x428] sm:$0xff]
    %v288 = vld [vmem:[#allocation5 + $0x430] sm:$0xff]
    %v289 = vld [vmem:[#allocation5 + $0x438] sm:$0xff]
    %v290 = vld [vmem:[#allocation5 + $0x440] sm:$0xff]
    %v291 = vld [vmem:[#allocation5 + $0x448] sm:$0xff]
    %v292 = vld [vmem:[#allocation5 + $0x450] sm:$0xff]
    %v293 = vld [vmem:[#allocation5 + $0x458] sm:$0xff]
    %v294 = vld [vmem:[#allocation5 + $0x460] sm:$0xff]
    %v295 = vld [vmem:[#allocation5 + $0x468] sm:$0xff]
    %v296 = vld [vmem:[#allocation5 + $0x470] sm:$0xff]
    %v297 = vld [vmem:[#allocation5 + $0x478] sm:$0xff]
    %v298 = vld [vmem:[#allocation5 + $0x480] sm:$0xff]
    %v299 = vld [vmem:[#allocation5 + $0x488] sm:$0xff]
    %v300 = vld [vmem:[#allocation5 + $0x490] sm:$0xff]
    %v301 = vld [vmem:[#allocation5 + $0x498] sm:$0xff]
    %v302 = vld [vmem:[#allocation5 + $0x4a0] sm:$0xff]
    %v303 = vld [vmem:[#allocation5 + $0x4a8] sm:$0xff]
    %v304 = vld [vmem:[#allocation5 + $0x4b0] sm:$0xff]
    %v305 = vld [vmem:[#allocation5 + $0x4b8] sm:$0xff]
    %v306 = vld [vmem:[#allocation5 + $0x4c0] sm:$0xff]
    %v307 = vld [vmem:[#allocation5 + $0x4c8] sm:$0xff]
    %v308 = vld [vmem:[#allocation5 + $0x4d0] sm:$0xff]
    %v309 = vld [vmem:[#allocation5 + $0x4d8] sm:$0xff]
    %v310 = vld [vmem:[#allocation5 + $0x4e0] sm:$0xff]
    %v311 = vld [vmem:[#allocation5 + $0x4e8] sm:$0xff]
    %v312 = vld [vmem:[#allocation5 + $0x4f0] sm:$0xff]
    %v313 = vld [vmem:[#allocation5 + $0x4f8] sm:$0xff]
    %v314 = vld [vmem:[#allocation5 + $0x500] sm:$0xff]
    %v315 = vld [vmem:[#allocation5 + $0x508] sm:$0xff]
    %v316 = vld [vmem:[#allocation5 + $0x510] sm:$0xff]
    %v317 = vld [vmem:[#allocation5 + $0x518] sm:$0xff]
    %v318 = vld [vmem:[#allocation5 + $0x520] sm:$0xff]
    %v319 = vld [vmem:[#allocation5 + $0x528] sm:$0xff]
    %v320 = vld [vmem:[#allocation5 + $0x530] sm:$0xff]
    %v321 = vld [vmem:[#allocation5 + $0x538] sm:$0xff]
    %v322 = vld [vmem:[#allocation5 + $0x540] sm:$0xff]
    %v323 = vld [vmem:[#allocation5 + $0x548] sm:$0xff]
    %v324 = vld [vmem:[#allocation5 + $0x550] sm:$0xff]
    %v325 = vld [vmem:[#allocation5 + $0x558] sm:$0xff]
    %v326 = vld [vmem:[#allocation5 + $0x560] sm:$0xff]
    %v327 = vld [vmem:[#allocation5 + $0x568] sm:$0xff]
    %v328 = vld [vmem:[#allocation5 + $0x570] sm:$0xff]
    %v329 = vld [vmem:[#allocation5 + $0x578] sm:$0xff]
    %v330 = vld [vmem:[#allocation5 + $0x580] sm:$0xff]
    %v331 = vld [vmem:[#allocation5 + $0x588] sm:$0xff]
    %v332 = vld [vmem:[#allocation5 + $0x590] sm:$0xff]
    %v333 = vld [vmem:[#allocation5 + $0x598] sm:$0xff]
    %v334 = vld [vmem:[#allocation5 + $0x5a0] sm:$0xff]
    %v335 = vld [vmem:[#allocation5 + $0x5a8] sm:$0xff]
    %v336 = vld [vmem:[#allocation5 + $0x5b0] sm:$0xff]
    %v337 = vld [vmem:[#allocation5 + $0x5b8] sm:$0xff]
    %v338 = vld [vmem:[#allocation5 + $0x5c0] sm:$0xff]
    %v339 = vld [vmem:[#allocation5 + $0x5c8] sm:$0xff]
    %v340 = vld [vmem:[#allocation5 + $0x5d0] sm:$0xff]
    %v341 = vld [vmem:[#allocation5 + $0x5d8] sm:$0xff]
    %v342 = vld [vmem:[#allocation5 + $0x5e0] sm:$0xff]
    %v343 = vld [vmem:[#allocation5 + $0x5e8] sm:$0xff]
    %v344 = vld [vmem:[#allocation5 + $0x5f0] sm:$0xff]
    %v345 = vld [vmem:[#allocation5 + $0x5f8] sm:$0xff]
    %v346 = vld [vmem:[#allocation5 + $0x600] sm:$0xff]
    %v347 = vld [vmem:[#allocation5 + $0x608] sm:$0xff]
    %v348 = vld [vmem:[#allocation5 + $0x610] sm:$0xff]
    %v349 = vld [vmem:[#allocation5 + $0x618] sm:$0xff]
    %v350 = vld [vmem:[#allocation7] sm:$0xf]
    %v352 = vlaneseq
    %v353 = vshrl.u32 %v352, 7
    %v354 = vsub.s32 0, %v353
    %v355 = vrot.slane %v350, %v354
    %v356 = vlaneseq
    %v357 = vshrl.u32 %v356, 7
    %v358 = vsub.s32 1, %v357
    %v359 = vrot.slane %v350, %v358
    %v360 = vlaneseq
    %v361 = vshrl.u32 %v360, 7
    %v362 = vsub.s32 2, %v361
    %v363 = vrot.slane %v350, %v362
    %v364 = vlaneseq
    %v365 = vshrl.u32 %v364, 7
    %v366 = vsub.s32 3, %v365
    %v367 = vrot.slane %v350, %v366
    %v568 = vunpack.c.l.b16 %v154
    %v569 = vunpack.c.h.b16 %v154
    %v570 = vunpack.c.l.b16 %v155
    %v571 = vunpack.c.h.b16 %v155
    %v572 = vunpack.c.l.b16 %v156
    %v573 = vunpack.c.h.b16 %v156
    %v574 = vunpack.c.l.b16 %v157
    %v575 = vunpack.c.h.b16 %v157
    %v576 = vunpack.c.l.b16 %v158
    %v577 = vunpack.c.h.b16 %v158
    %v578 = vunpack.c.l.b16 %v159
    %v579 = vunpack.c.h.b16 %v159
    %v580 = vunpack.c.l.b16 %v160
    %v581 = vunpack.c.h.b16 %v160
    %v582 = vunpack.c.l.b16 %v161
    %v583 = vunpack.c.h.b16 %v161
    %v584 = vunpack.c.l.b16 %v162
    %v585 = vunpack.c.h.b16 %v162
    %v586 = vunpack.c.l.b16 %v163
    %v587 = vunpack.c.h.b16 %v163
    %v588 = vunpack.c.l.b16 %v164
    %v589 = vunpack.c.h.b16 %v164
    %v590 = vunpack.c.l.b16 %v165
    %v591 = vunpack.c.h.b16 %v165
    %v592 = vunpack.c.l.b16 %v166
    %v593 = vunpack.c.h.b16 %v166
    %v594 = vunpack.c.l.b16 %v167
    %v595 = vunpack.c.h.b16 %v167
    %v596 = vunpack.c.l.b16 %v168
    %v597 = vunpack.c.h.b16 %v168
    %v598 = vunpack.c.l.b16 %v169
    %v599 = vunpack.c.h.b16 %v169
    %v600 = vunpack.c.l.b16 %v170
    %v601 = vunpack.c.h.b16 %v170
    %v602 = vunpack.c.l.b16 %v171
    %v603 = vunpack.c.h.b16 %v171
    %v604 = vunpack.c.l.b16 %v172
    %v605 = vunpack.c.h.b16 %v172
    %v606 = vunpack.c.l.b16 %v173
    %v607 = vunpack.c.h.b16 %v173
    %v608 = vunpack.c.l.b16 %v174
    %v609 = vunpack.c.h.b16 %v174
    %v610 = vunpack.c.l.b16 %v175
    %v611 = vunpack.c.h.b16 %v175
    %v612 = vunpack.c.l.b16 %v176
    %v613 = vunpack.c.h.b16 %v176
    %v614 = vunpack.c.l.b16 %v177
    %v615 = vunpack.c.h.b16 %v177
    %v616 = vunpack.c.l.b16 %v178
    %v617 = vunpack.c.h.b16 %v178
    %v618 = vunpack.c.l.b16 %v179
    %v619 = vunpack.c.h.b16 %v179
    %v620 = vunpack.c.l.b16 %v180
    %v621 = vunpack.c.h.b16 %v180
    %v622 = vunpack.c.l.b16 %v181
    %v623 = vunpack.c.h.b16 %v181
    %v624 = vunpack.c.l.b16 %v182
    %v625 = vunpack.c.h.b16 %v182
    %v626 = vunpack.c.l.b16 %v183
    %v627 = vunpack.c.h.b16 %v183
    %v628 = vunpack.c.l.b16 %v184
    %v629 = vunpack.c.h.b16 %v184
    %v630 = vunpack.c.l.b16 %v185
    %v631 = vunpack.c.h.b16 %v185
    %v632 = vunpack.c.l.b16 %v186
    %v633 = vunpack.c.h.b16 %v186
    %v634 = vunpack.c.l.b16 %v187
    %v635 = vunpack.c.h.b16 %v187
    %v636 = vunpack.c.l.b16 %v188
    %v637 = vunpack.c.h.b16 %v188
    %v638 = vunpack.c.l.b16 %v189
    %v639 = vunpack.c.h.b16 %v189
    %v640 = vunpack.c.l.b16 %v190
    %v641 = vunpack.c.h.b16 %v190
    %v642 = vunpack.c.l.b16 %v191
    %v643 = vunpack.c.h.b16 %v191
    %v644 = vunpack.c.l.b16 %v192
    %v645 = vunpack.c.h.b16 %v192
    %v646 = vunpack.c.l.b16 %v193
    %v647 = vunpack.c.h.b16 %v193
    %v648 = vunpack.c.l.b16 %v194
    %v649 = vunpack.c.h.b16 %v194
    %v650 = vunpack.c.l.b16 %v195
    %v651 = vunpack.c.h.b16 %v195
    %v652 = vunpack.c.l.b16 %v196
    %v653 = vunpack.c.h.b16 %v196
    %v654 = vunpack.c.l.b16 %v197
    %v655 = vunpack.c.h.b16 %v197
    %v656 = vunpack.c.l.b16 %v198
    %v657 = vunpack.c.h.b16 %v198
    %v658 = vunpack.c.l.b16 %v199
    %v659 = vunpack.c.h.b16 %v199
    %v660 = vunpack.c.l.b16 %v200
    %v661 = vunpack.c.h.b16 %v200
    %v662 = vunpack.c.l.b16 %v201
    %v663 = vunpack.c.h.b16 %v201
    %v664 = vunpack.c.l.b16 %v202
    %v665 = vunpack.c.h.b16 %v202
    %v666 = vunpack.c.l.b16 %v203
    %v667 = vunpack.c.h.b16 %v203
    %v668 = vunpack.c.l.b16 %v204
    %v669 = vunpack.c.h.b16 %v204
    %v670 = vunpack.c.l.b16 %v205
    %v671 = vunpack.c.h.b16 %v205
    %v672 = vunpack.c.l.b16 %v206
    %v673 = vunpack.c.h.b16 %v206
    %v674 = vunpack.c.l.b16 %v207
    %v675 = vunpack.c.h.b16 %v207
    %v676 = vunpack.c.l.b16 %v208
    %v677 = vunpack.c.h.b16 %v208
    %v678 = vunpack.c.l.b16 %v209
    %v679 = vunpack.c.h.b16 %v209
    %v680 = vunpack.c.l.b16 %v210
    %v681 = vunpack.c.h.b16 %v210
    %v682 = vunpack.c.l.b16 %v211
    %v683 = vunpack.c.h.b16 %v211
    %v684 = vunpack.c.l.b16 %v212
    %v685 = vunpack.c.h.b16 %v212
    %v686 = vunpack.c.l.b16 %v213
    %v687 = vunpack.c.h.b16 %v213
    %v688 = vunpack.c.l.b16 %v214
    %v689 = vunpack.c.h.b16 %v214
    %v690 = vunpack.c.l.b16 %v215
    %v691 = vunpack.c.h.b16 %v215
    %v692 = vunpack.c.l.b16 %v216
    %v693 = vunpack.c.h.b16 %v216
    %v694 = vunpack.c.l.b16 %v217
    %v695 = vunpack.c.h.b16 %v217
    %v696 = vunpack.c.l.b16 %v218
    %v697 = vunpack.c.h.b16 %v218
    %v698 = vunpack.c.l.b16 %v219
    %v699 = vunpack.c.h.b16 %v219
    %v700 = vunpack.c.l.b16 %v220
    %v701 = vunpack.c.h.b16 %v220
    %v702 = vunpack.c.l.b16 %v221
    %v703 = vunpack.c.h.b16 %v221
    %v704 = vunpack.c.l.b16 %v222
    %v705 = vunpack.c.h.b16 %v222
    %v706 = vunpack.c.l.b16 %v223
    %v707 = vunpack.c.h.b16 %v223
    %v708 = vunpack.c.l.b16 %v224
    %v709 = vunpack.c.h.b16 %v224
    %v710 = vunpack.c.l.b16 %v225
    %v711 = vunpack.c.h.b16 %v225
    %v712 = vunpack.c.l.b16 %v226
    %v713 = vunpack.c.h.b16 %v226
    %v714 = vunpack.c.l.b16 %v227
    %v715 = vunpack.c.h.b16 %v227
    %v716 = vunpack.c.l.b16 %v228
    %v717 = vunpack.c.h.b16 %v228
    %v718 = vunpack.c.l.b16 %v229
    %v719 = vunpack.c.h.b16 %v229
    %v720 = vunpack.c.l.b16 %v230
    %v721 = vunpack.c.h.b16 %v230
    %v722 = vunpack.c.l.b16 %v231
    %v723 = vunpack.c.h.b16 %v231
    %v724 = vunpack.c.l.b16 %v232
    %v725 = vunpack.c.h.b16 %v232
    %v726 = vunpack.c.l.b16 %v233
    %v727 = vunpack.c.h.b16 %v233
    %v728 = vunpack.c.l.b16 %v234
    %v729 = vunpack.c.h.b16 %v234
    %v730 = vunpack.c.l.b16 %v235
    %v731 = vunpack.c.h.b16 %v235
    %v732 = vunpack.c.l.b16 %v236
    %v733 = vunpack.c.h.b16 %v236
    %v734 = vunpack.c.l.b16 %v237
    %v735 = vunpack.c.h.b16 %v237
    %v736 = vunpack.c.l.b16 %v238
    %v737 = vunpack.c.h.b16 %v238
    %v738 = vunpack.c.l.b16 %v239
    %v739 = vunpack.c.h.b16 %v239
    %v740 = vunpack.c.l.b16 %v240
    %v741 = vunpack.c.h.b16 %v240
    %v742 = vunpack.c.l.b16 %v241
    %v743 = vunpack.c.h.b16 %v241
    %v744 = vunpack.c.l.b16 %v242
    %v745 = vunpack.c.h.b16 %v242
    %v746 = vunpack.c.l.b16 %v243
    %v747 = vunpack.c.h.b16 %v243
    %v748 = vunpack.c.l.b16 %v244
    %v749 = vunpack.c.h.b16 %v244
    %v750 = vunpack.c.l.b16 %v245
    %v751 = vunpack.c.h.b16 %v245
    %v752 = vunpack.c.l.b16 %v246
    %v753 = vunpack.c.h.b16 %v246
    %v754 = vunpack.c.l.b16 %v247
    %v755 = vunpack.c.h.b16 %v247
    %v756 = vunpack.c.l.b16 %v248
    %v757 = vunpack.c.h.b16 %v248
    %v758 = vunpack.c.l.b16 %v249
    %v759 = vunpack.c.h.b16 %v249
    %v760 = vunpack.c.l.b16 %v250
    %v761 = vunpack.c.h.b16 %v250
    %v762 = vunpack.c.l.b16 %v251
    %v763 = vunpack.c.h.b16 %v251
    %v764 = vunpack.c.l.b16 %v252
    %v765 = vunpack.c.h.b16 %v252
    %v766 = vunpack.c.l.b16 %v253
    %v767 = vunpack.c.h.b16 %v253
    %v768 = vunpack.c.l.b16 %v254
    %v769 = vunpack.c.h.b16 %v254
    %v770 = vunpack.c.l.b16 %v255
    %v771 = vunpack.c.h.b16 %v255
    %v772 = vunpack.c.l.b16 %v256
    %v773 = vunpack.c.h.b16 %v256
    %v774 = vunpack.c.l.b16 %v257
    %v775 = vunpack.c.h.b16 %v257
    %v776 = vunpack.c.l.b16 %v258
    %v777 = vunpack.c.h.b16 %v258
    %v778 = vunpack.c.l.b16 %v259
    %v779 = vunpack.c.h.b16 %v259
    %v780 = vunpack.c.l.b16 %v260
    %v781 = vunpack.c.h.b16 %v260
    %v782 = vunpack.c.l.b16 %v261
    %v783 = vunpack.c.h.b16 %v261
    %v784 = vunpack.c.l.b16 %v262
    %v785 = vunpack.c.h.b16 %v262
    %v786 = vunpack.c.l.b16 %v263
    %v787 = vunpack.c.h.b16 %v263
    %v788 = vunpack.c.l.b16 %v264
    %v789 = vunpack.c.h.b16 %v264
    %v790 = vunpack.c.l.b16 %v265
    %v791 = vunpack.c.h.b16 %v265
    %v792 = vunpack.c.l.b16 %v266
    %v793 = vunpack.c.h.b16 %v266
    %v794 = vunpack.c.l.b16 %v267
    %v795 = vunpack.c.h.b16 %v267
    %v796 = vunpack.c.l.b16 %v268
    %v797 = vunpack.c.h.b16 %v268
    %v798 = vunpack.c.l.b16 %v269
    %v799 = vunpack.c.h.b16 %v269
    %v800 = vunpack.c.l.b16 %v270
    %v801 = vunpack.c.h.b16 %v270
    %v802 = vunpack.c.l.b16 %v271
    %v803 = vunpack.c.h.b16 %v271
    %v804 = vunpack.c.l.b16 %v272
    %v805 = vunpack.c.h.b16 %v272
    %v806 = vunpack.c.l.b16 %v273
    %v807 = vunpack.c.h.b16 %v273
    %v808 = vunpack.c.l.b16 %v274
    %v809 = vunpack.c.h.b16 %v274
    %v810 = vunpack.c.l.b16 %v275
    %v811 = vunpack.c.h.b16 %v275
    %v812 = vunpack.c.l.b16 %v276
    %v813 = vunpack.c.h.b16 %v276
    %v814 = vunpack.c.l.b16 %v277
    %v815 = vunpack.c.h.b16 %v277
    %v816 = vunpack.c.l.b16 %v278
    %v817 = vunpack.c.h.b16 %v278
    %v818 = vunpack.c.l.b16 %v279
    %v819 = vunpack.c.h.b16 %v279
    %v820 = vunpack.c.l.b16 %v280
    %v821 = vunpack.c.h.b16 %v280
    %v822 = vunpack.c.l.b16 %v281
    %v823 = vunpack.c.h.b16 %v281
    %v824 = vunpack.c.l.b16 %v282
    %v825 = vunpack.c.h.b16 %v282
    %v826 = vunpack.c.l.b16 %v283
    %v827 = vunpack.c.h.b16 %v283
    %v828 = vunpack.c.l.b16 %v284
    %v829 = vunpack.c.h.b16 %v284
    %v830 = vunpack.c.l.b16 %v285
    %v831 = vunpack.c.h.b16 %v285
    %v832 = vunpack.c.l.b16 %v286
    %v833 = vunpack.c.h.b16 %v286
    %v834 = vunpack.c.l.b16 %v287
    %v835 = vunpack.c.h.b16 %v287
    %v836 = vunpack.c.l.b16 %v288
    %v837 = vunpack.c.h.b16 %v288
    %v838 = vunpack.c.l.b16 %v289
    %v839 = vunpack.c.h.b16 %v289
    %v840 = vunpack.c.l.b16 %v290
    %v841 = vunpack.c.h.b16 %v290
    %v842 = vunpack.c.l.b16 %v291
    %v843 = vunpack.c.h.b16 %v291
    %v844 = vunpack.c.l.b16 %v292
    %v845 = vunpack.c.h.b16 %v292
    %v846 = vunpack.c.l.b16 %v293
    %v847 = vunpack.c.h.b16 %v293
    %v848 = vunpack.c.l.b16 %v294
    %v849 = vunpack.c.h.b16 %v294
    %v850 = vunpack.c.l.b16 %v295
    %v851 = vunpack.c.h.b16 %v295
    %v852 = vunpack.c.l.b16 %v296
    %v853 = vunpack.c.h.b16 %v296
    %v854 = vunpack.c.l.b16 %v297
    %v855 = vunpack.c.h.b16 %v297
    %v856 = vunpack.c.l.b16 %v298
    %v857 = vunpack.c.h.b16 %v298
    %v858 = vunpack.c.l.b16 %v299
    %v859 = vunpack.c.h.b16 %v299
    %v860 = vunpack.c.l.b16 %v300
    %v861 = vunpack.c.h.b16 %v300
    %v862 = vunpack.c.l.b16 %v301
    %v863 = vunpack.c.h.b16 %v301
    %v864 = vunpack.c.l.b16 %v302
    %v865 = vunpack.c.h.b16 %v302
    %v866 = vunpack.c.l.b16 %v303
    %v867 = vunpack.c.h.b16 %v303
    %v868 = vunpack.c.l.b16 %v304
    %v869 = vunpack.c.h.b16 %v304
    %v870 = vunpack.c.l.b16 %v305
    %v871 = vunpack.c.h.b16 %v305
    %v872 = vunpack.c.l.b16 %v306
    %v873 = vunpack.c.h.b16 %v306
    %v874 = vunpack.c.l.b16 %v307
    %v875 = vunpack.c.h.b16 %v307
    %v876 = vunpack.c.l.b16 %v308
    %v877 = vunpack.c.h.b16 %v308
    %v878 = vunpack.c.l.b16 %v309
    %v879 = vunpack.c.h.b16 %v309
    %v880 = vunpack.c.l.b16 %v310
    %v881 = vunpack.c.h.b16 %v310
    %v882 = vunpack.c.l.b16 %v311
    %v883 = vunpack.c.h.b16 %v311
    %v884 = vunpack.c.l.b16 %v312
    %v885 = vunpack.c.h.b16 %v312
    %v886 = vunpack.c.l.b16 %v313
    %v887 = vunpack.c.h.b16 %v313
    %v888 = vunpack.c.l.b16 %v314
    %v889 = vunpack.c.h.b16 %v314
    %v890 = vunpack.c.l.b16 %v315
    %v891 = vunpack.c.h.b16 %v315
    %v892 = vunpack.c.l.b16 %v316
    %v893 = vunpack.c.h.b16 %v316
    %v894 = vunpack.c.l.b16 %v317
    %v895 = vunpack.c.h.b16 %v317
    %v896 = vunpack.c.l.b16 %v318
    %v897 = vunpack.c.h.b16 %v318
    %v898 = vunpack.c.l.b16 %v319
    %v899 = vunpack.c.h.b16 %v319
    %v900 = vunpack.c.l.b16 %v320
    %v901 = vunpack.c.h.b16 %v320
    %v902 = vunpack.c.l.b16 %v321
    %v903 = vunpack.c.h.b16 %v321
    %v904 = vunpack.c.l.b16 %v322
    %v905 = vunpack.c.h.b16 %v322
    %v906 = vunpack.c.l.b16 %v323
    %v907 = vunpack.c.h.b16 %v323
    %v908 = vunpack.c.l.b16 %v324
    %v909 = vunpack.c.h.b16 %v324
    %v910 = vunpack.c.l.b16 %v325
    %v911 = vunpack.c.h.b16 %v325
    %v912 = vunpack.c.l.b16 %v326
    %v913 = vunpack.c.h.b16 %v326
    %v914 = vunpack.c.l.b16 %v327
    %v915 = vunpack.c.h.b16 %v327
    %v916 = vunpack.c.l.b16 %v328
    %v917 = vunpack.c.h.b16 %v328
    %v918 = vunpack.c.l.b16 %v329
    %v919 = vunpack.c.h.b16 %v329
    %v920 = vunpack.c.l.b16 %v330
    %v921 = vunpack.c.h.b16 %v330
    %v922 = vunpack.c.l.b16 %v331
    %v923 = vunpack.c.h.b16 %v331
    %v924 = vunpack.c.l.b16 %v332
    %v925 = vunpack.c.h.b16 %v332
    %v926 = vunpack.c.l.b16 %v333
    %v927 = vunpack.c.h.b16 %v333
    %v928 = vunpack.c.l.b16 %v334
    %v929 = vunpack.c.h.b16 %v334
    %v930 = vunpack.c.l.b16 %v335
    %v931 = vunpack.c.h.b16 %v335
    %v932 = vunpack.c.l.b16 %v336
    %v933 = vunpack.c.h.b16 %v336
    %v934 = vunpack.c.l.b16 %v337
    %v935 = vunpack.c.h.b16 %v337
    %v936 = vunpack.c.l.b16 %v338
    %v937 = vunpack.c.h.b16 %v338
    %v938 = vunpack.c.l.b16 %v339
    %v939 = vunpack.c.h.b16 %v339
    %v940 = vunpack.c.l.b16 %v340
    %v941 = vunpack.c.h.b16 %v340
    %v942 = vunpack.c.l.b16 %v341
    %v943 = vunpack.c.h.b16 %v341
    %v944 = vunpack.c.l.b16 %v342
    %v945 = vunpack.c.h.b16 %v342
    %v946 = vunpack.c.l.b16 %v343
    %v947 = vunpack.c.h.b16 %v343
    %v948 = vunpack.c.l.b16 %v344
    %v949 = vunpack.c.h.b16 %v344
    %v950 = vunpack.c.l.b16 %v345
    %v951 = vunpack.c.h.b16 %v345
    %v952 = vunpack.c.l.b16 %v346
    %v953 = vunpack.c.h.b16 %v346
    %v954 = vunpack.c.l.b16 %v347
    %v955 = vunpack.c.h.b16 %v347
    %v956 = vunpack.c.l.b16 %v348
    %v957 = vunpack.c.h.b16 %v348
    %v958 = vunpack.c.l.b16 %v349
    %v959 = vunpack.c.h.b16 %v349
    %v960 = vpack.c.b16 %v572, %v568
    %v961 = vpack.c.b16 %v573, %v569
    %v962 = vpack.c.b16 %v574, %v570
    %v963 = vpack.c.b16 %v575, %v571
    %v964 = vpack.c.b16 %v580, %v576
    %v965 = vpack.c.b16 %v581, %v577
    %v966 = vpack.c.b16 %v582, %v578
    %v967 = vpack.c.b16 %v583, %v579
    %v968 = vpack.c.b16 %v588, %v584
    %v969 = vpack.c.b16 %v589, %v585
    %v970 = vpack.c.b16 %v590, %v586
    %v971 = vpack.c.b16 %v591, %v587
    %v972 = vpack.c.b16 %v596, %v592
    %v973 = vpack.c.b16 %v597, %v593
    %v974 = vpack.c.b16 %v598, %v594
    %v975 = vpack.c.b16 %v599, %v595
    %v976 = vpack.c.b16 %v604, %v600
    %v977 = vpack.c.b16 %v605, %v601
    %v978 = vpack.c.b16 %v606, %v602
    %v979 = vpack.c.b16 %v607, %v603
    %v980 = vpack.c.b16 %v612, %v608
    %v981 = vpack.c.b16 %v613, %v609
    %v982 = vpack.c.b16 %v614, %v610
    %v983 = vpack.c.b16 %v615, %v611
    %v984 = vpack.c.b16 %v620, %v616
    %v985 = vpack.c.b16 %v621, %v617
    %v986 = vpack.c.b16 %v622, %v618
    %v987 = vpack.c.b16 %v623, %v619
    %v988 = vpack.c.b16 %v628, %v624
    %v989 = vpack.c.b16 %v629, %v625
    %v990 = vpack.c.b16 %v630, %v626
    %v991 = vpack.c.b16 %v631, %v627
    %v992 = vpack.c.b16 %v636, %v632
    %v993 = vpack.c.b16 %v637, %v633
    %v994 = vpack.c.b16 %v638, %v634
    %v995 = vpack.c.b16 %v639, %v635
    %v996 = vpack.c.b16 %v644, %v640
    %v997 = vpack.c.b16 %v645, %v641
    %v998 = vpack.c.b16 %v646, %v642
    %v999 = vpack.c.b16 %v647, %v643
    %v1000 = vpack.c.b16 %v652, %v648
    %v1001 = vpack.c.b16 %v653, %v649
    %v1002 = vpack.c.b16 %v654, %v650
    %v1003 = vpack.c.b16 %v655, %v651
    %v1004 = vpack.c.b16 %v660, %v656
    %v1005 = vpack.c.b16 %v661, %v657
    %v1006 = vpack.c.b16 %v662, %v658
    %v1007 = vpack.c.b16 %v663, %v659
    %v1008 = vpack.c.b16 %v668, %v664
    %v1009 = vpack.c.b16 %v669, %v665
    %v1010 = vpack.c.b16 %v670, %v666
    %v1011 = vpack.c.b16 %v671, %v667
    %v1012 = vpack.c.b16 %v676, %v672
    %v1013 = vpack.c.b16 %v677, %v673
    %v1014 = vpack.c.b16 %v678, %v674
    %v1015 = vpack.c.b16 %v679, %v675
    %v1016 = vpack.c.b16 %v684, %v680
    %v1017 = vpack.c.b16 %v685, %v681
    %v1018 = vpack.c.b16 %v686, %v682
    %v1019 = vpack.c.b16 %v687, %v683
    %v1020 = vpack.c.b16 %v692, %v688
    %v1021 = vpack.c.b16 %v693, %v689
    %v1022 = vpack.c.b16 %v694, %v690
    %v1023 = vpack.c.b16 %v695, %v691
    %v1024 = vpack.c.b16 %v700, %v696
    %v1025 = vpack.c.b16 %v701, %v697
    %v1026 = vpack.c.b16 %v702, %v698
    %v1027 = vpack.c.b16 %v703, %v699
    %v1028 = vpack.c.b16 %v708, %v704
    %v1029 = vpack.c.b16 %v709, %v705
    %v1030 = vpack.c.b16 %v710, %v706
    %v1031 = vpack.c.b16 %v711, %v707
    %v1032 = vpack.c.b16 %v716, %v712
    %v1033 = vpack.c.b16 %v717, %v713
    %v1034 = vpack.c.b16 %v718, %v714
    %v1035 = vpack.c.b16 %v719, %v715
    %v1036 = vpack.c.b16 %v724, %v720
    %v1037 = vpack.c.b16 %v725, %v721
    %v1038 = vpack.c.b16 %v726, %v722
    %v1039 = vpack.c.b16 %v727, %v723
    %v1040 = vpack.c.b16 %v732, %v728
    %v1041 = vpack.c.b16 %v733, %v729
    %v1042 = vpack.c.b16 %v734, %v730
    %v1043 = vpack.c.b16 %v735, %v731
    %v1044 = vpack.c.b16 %v740, %v736
    %v1045 = vpack.c.b16 %v741, %v737
    %v1046 = vpack.c.b16 %v742, %v738
    %v1047 = vpack.c.b16 %v743, %v739
    %v1048 = vpack.c.b16 %v748, %v744
    %v1049 = vpack.c.b16 %v749, %v745
    %v1050 = vpack.c.b16 %v750, %v746
    %v1051 = vpack.c.b16 %v751, %v747
    %v1052 = vpack.c.b16 %v756, %v752
    %v1053 = vpack.c.b16 %v757, %v753
    %v1054 = vpack.c.b16 %v758, %v754
    %v1055 = vpack.c.b16 %v759, %v755
    %v1056 = vpack.c.b16 %v764, %v760
    %v1057 = vpack.c.b16 %v765, %v761
    %v1058 = vpack.c.b16 %v766, %v762
    %v1059 = vpack.c.b16 %v767, %v763
    %v1060 = vpack.c.b16 %v772, %v768
    %v1061 = vpack.c.b16 %v773, %v769
    %v1062 = vpack.c.b16 %v774, %v770
    %v1063 = vpack.c.b16 %v775, %v771
    %v1064 = vpack.c.b16 %v780, %v776
    %v1065 = vpack.c.b16 %v781, %v777
    %v1066 = vpack.c.b16 %v782, %v778
    %v1067 = vpack.c.b16 %v783, %v779
    %v1068 = vpack.c.b16 %v788, %v784
    %v1069 = vpack.c.b16 %v789, %v785
    %v1070 = vpack.c.b16 %v790, %v786
    %v1071 = vpack.c.b16 %v791, %v787
    %v1072 = vpack.c.b16 %v796, %v792
    %v1073 = vpack.c.b16 %v797, %v793
    %v1074 = vpack.c.b16 %v798, %v794
    %v1075 = vpack.c.b16 %v799, %v795
    %v1076 = vpack.c.b16 %v804, %v800
    %v1077 = vpack.c.b16 %v805, %v801
    %v1078 = vpack.c.b16 %v806, %v802
    %v1079 = vpack.c.b16 %v807, %v803
    %v1080 = vpack.c.b16 %v812, %v808
    %v1081 = vpack.c.b16 %v813, %v809
    %v1082 = vpack.c.b16 %v814, %v810
    %v1083 = vpack.c.b16 %v815, %v811
    %v1084 = vpack.c.b16 %v820, %v816
    %v1085 = vpack.c.b16 %v821, %v817
    %v1086 = vpack.c.b16 %v822, %v818
    %v1087 = vpack.c.b16 %v823, %v819
    %v1088 = vpack.c.b16 %v828, %v824
    %v1089 = vpack.c.b16 %v829, %v825
    %v1090 = vpack.c.b16 %v830, %v826
    %v1091 = vpack.c.b16 %v831, %v827
    %v1092 = vpack.c.b16 %v836, %v832
    %v1093 = vpack.c.b16 %v837, %v833
    %v1094 = vpack.c.b16 %v838, %v834
    %v1095 = vpack.c.b16 %v839, %v835
    %v1096 = vpack.c.b16 %v844, %v840
    %v1097 = vpack.c.b16 %v845, %v841
    %v1098 = vpack.c.b16 %v846, %v842
    %v1099 = vpack.c.b16 %v847, %v843
    %v1100 = vpack.c.b16 %v852, %v848
    %v1101 = vpack.c.b16 %v853, %v849
    %v1102 = vpack.c.b16 %v854, %v850
    %v1103 = vpack.c.b16 %v855, %v851
    %v1104 = vpack.c.b16 %v860, %v856
    %v1105 = vpack.c.b16 %v861, %v857
    %v1106 = vpack.c.b16 %v862, %v858
    %v1107 = vpack.c.b16 %v863, %v859
    %v1108 = vpack.c.b16 %v868, %v864
    %v1109 = vpack.c.b16 %v869, %v865
    %v1110 = vpack.c.b16 %v870, %v866
    %v1111 = vpack.c.b16 %v871, %v867
    %v1112 = vpack.c.b16 %v876, %v872
    %v1113 = vpack.c.b16 %v877, %v873
    %v1114 = vpack.c.b16 %v878, %v874
    %v1115 = vpack.c.b16 %v879, %v875
    %v1116 = vpack.c.b16 %v884, %v880
    %v1117 = vpack.c.b16 %v885, %v881
    %v1118 = vpack.c.b16 %v886, %v882
    %v1119 = vpack.c.b16 %v887, %v883
    %v1120 = vpack.c.b16 %v892, %v888
    %v1121 = vpack.c.b16 %v893, %v889
    %v1122 = vpack.c.b16 %v894, %v890
    %v1123 = vpack.c.b16 %v895, %v891
    %v1124 = vpack.c.b16 %v900, %v896
    %v1125 = vpack.c.b16 %v901, %v897
    %v1126 = vpack.c.b16 %v902, %v898
    %v1127 = vpack.c.b16 %v903, %v899
    %v1128 = vpack.c.b16 %v908, %v904
    %v1129 = vpack.c.b16 %v909, %v905
    %v1130 = vpack.c.b16 %v910, %v906
    %v1131 = vpack.c.b16 %v911, %v907
    %v1132 = vpack.c.b16 %v916, %v912
    %v1133 = vpack.c.b16 %v917, %v913
    %v1134 = vpack.c.b16 %v918, %v914
    %v1135 = vpack.c.b16 %v919, %v915
    %v1136 = vpack.c.b16 %v924, %v920
    %v1137 = vpack.c.b16 %v925, %v921
    %v1138 = vpack.c.b16 %v926, %v922
    %v1139 = vpack.c.b16 %v927, %v923
    %v1140 = vpack.c.b16 %v932, %v928
    %v1141 = vpack.c.b16 %v933, %v929
    %v1142 = vpack.c.b16 %v934, %v930
    %v1143 = vpack.c.b16 %v935, %v931
    %v1144 = vpack.c.b16 %v940, %v936
    %v1145 = vpack.c.b16 %v941, %v937
    %v1146 = vpack.c.b16 %v942, %v938
    %v1147 = vpack.c.b16 %v943, %v939
    %v1148 = vpack.c.b16 %v948, %v944
    %v1149 = vpack.c.b16 %v949, %v945
    %v1150 = vpack.c.b16 %v950, %v946
    %v1151 = vpack.c.b16 %v951, %v947
    %v1152 = vpack.c.b16 %v956, %v952
    %v1153 = vpack.c.b16 %v957, %v953
    %v1154 = vpack.c.b16 %v958, %v954
    %v1155 = vpack.c.b16 %v959, %v955
    %vm1352 = vcmask 130048
    %v1354 = vsel %vm1352, %v153, 0
    %1356 = vmatprep.subr.bf16.mxu0 %v989
    %1357 = vmatpush1.bf16.msra.mxu0 %v988
    %1358 = vmatprep.subr.bf16.mxu0 %v985
    %1359 = vmatpush1.bf16.msra.mxu0 %v984
    %1360 = vmatprep.subr.bf16.mxu0 %v981
    %1361 = vmatpush1.bf16.msra.mxu0 %v980
    %1362 = vmatprep.subr.bf16.mxu0 %v977
    %1363 = vmatpush1.bf16.msra.mxu0 %v976
    %1364 = vmatprep.subr.bf16.mxu0 %v973
    %1365 = vmatpush1.bf16.msra.mxu0 %v972
    %1366 = vmatprep.subr.bf16.mxu0 %v969
    %1367 = vmatpush1.bf16.msra.mxu0 %v968
    %1368 = vmatprep.subr.bf16.mxu0 %v965
    %1369 = vmatpush1.bf16.msra.mxu0 %v964
    %1370 = vmatprep.subr.bf16.mxu0 %v961
    %1371 = vmatpush1.bf16.msra.mxu0 %v960
    %1372 = vmatprep.subr.bf16.mxu0 %v1021
    %1373 = vmatpush2.bf16.msra.mxu0 %v1020
    %1374 = vmatprep.subr.bf16.mxu0 %v1017
    %1375 = vmatpush2.bf16.msra.mxu0 %v1016
    %1376 = vmatprep.subr.bf16.mxu0 %v1013
    %1377 = vmatpush2.bf16.msra.mxu0 %v1012
    %1378 = vmatprep.subr.bf16.mxu0 %v1009
    %1379 = vmatpush2.bf16.msra.mxu0 %v1008
    %1380 = vmatprep.subr.bf16.mxu0 %v1005
    %1381 = vmatpush2.bf16.msra.mxu0 %v1004
    %1382 = vmatprep.subr.bf16.mxu0 %v1001
    %1383 = vmatpush2.bf16.msra.mxu0 %v1000
    %1384 = vmatprep.subr.bf16.mxu0 %v997
    %1385 = vmatpush2.bf16.msra.mxu0 %v996
    %1386 = vmatprep.subr.bf16.mxu0 %v993
    %1387 = vmatpush2.bf16.msra.mxu0 %v992
    %1388 = vmatprep.mubr.bf16.mxu0 %v148
    %1389 = vmatmul.mubr.bf16.gmra.mxu0 %v147
    %v1390 = vpop.f32.mrf.mxu0
    %v1391 = vadd.f32 %v355, %v1390
    %v1392 = vpop.f32.mrf.mxu0
    %v1393 = vadd.f32 %v359, %v1392
    %v1394 = vpop.f32.mrf.mxu0
    %v1395 = vadd.f32 %v355, %v1394
    %v1396 = vpop.f32.mrf.mxu0
    %v1397 = vadd.f32 %v359, %v1396
    %1398 = vdwg.mxu0
    %1399 = vmatprep.subr.bf16.mxu0 %v1053
    %1400 = vmatpush1.bf16.msra.mxu0 %v1052
    %1401 = vmatprep.subr.bf16.mxu0 %v1049
    %1402 = vmatpush1.bf16.msra.mxu0 %v1048
    %1403 = vmatprep.subr.bf16.mxu0 %v1045
    %1404 = vmatpush1.bf16.msra.mxu0 %v1044
    %1405 = vmatprep.subr.bf16.mxu0 %v1041
    %1406 = vmatpush1.bf16.msra.mxu0 %v1040
    %1407 = vmatprep.subr.bf16.mxu0 %v1037
    %1408 = vmatpush1.bf16.msra.mxu0 %v1036
    %1409 = vmatprep.subr.bf16.mxu0 %v1033
    %1410 = vmatpush1.bf16.msra.mxu0 %v1032
    %1411 = vmatprep.subr.bf16.mxu0 %v1029
    %1412 = vmatpush1.bf16.msra.mxu0 %v1028
    %1413 = vmatprep.subr.bf16.mxu0 %v1025
    %1414 = vmatpush1.bf16.msra.mxu0 %v1024
    %1415 = vmatprep.subr.bf16.mxu0 %v1085
    %1416 = vmatpush2.bf16.msra.mxu0 %v1084
    %1417 = vmatprep.subr.bf16.mxu0 %v1081
    %1418 = vmatpush2.bf16.msra.mxu0 %v1080
    %1419 = vmatprep.subr.bf16.mxu0 %v1077
    %1420 = vmatpush2.bf16.msra.mxu0 %v1076
    %1421 = vmatprep.subr.bf16.mxu0 %v1073
    %1422 = vmatpush2.bf16.msra.mxu0 %v1072
    %1423 = vmatprep.subr.bf16.mxu0 %v1069
    %1424 = vmatpush2.bf16.msra.mxu0 %v1068
    %1425 = vmatprep.subr.bf16.mxu0 %v1065
    %1426 = vmatpush2.bf16.msra.mxu0 %v1064
    %1427 = vmatprep.subr.bf16.mxu0 %v1061
    %1428 = vmatpush2.bf16.msra.mxu0 %v1060
    %1429 = vmatprep.subr.bf16.mxu0 %v1057
    %1430 = vmatpush2.bf16.msra.mxu0 %v1056
    %1431 = vmatprep.mubr.bf16.mxu0 %v150
    %1432 = vmatmul.mubr.bf16.gmra.mxu0 %v149
    %v1433 = vpop.f32.mrf.mxu0
    %v1434 = vadd.f32 %v1391, %v1433
    %v1435 = vpop.f32.mrf.mxu0
    %v1436 = vadd.f32 %v1393, %v1435
    %v1437 = vpop.f32.mrf.mxu0
    %v1438 = vadd.f32 %v1395, %v1437
    %v1439 = vpop.f32.mrf.mxu0
    %v1440 = vadd.f32 %v1397, %v1439
    %1441 = vdwg.mxu0
    %1442 = vmatprep.subr.bf16.mxu0 %v1117
    %1443 = vmatpush1.bf16.msra.mxu0 %v1116
    %1444 = vmatprep.subr.bf16.mxu0 %v1113
    %1445 = vmatpush1.bf16.msra.mxu0 %v1112
    %1446 = vmatprep.subr.bf16.mxu0 %v1109
    %1447 = vmatpush1.bf16.msra.mxu0 %v1108
    %1448 = vmatprep.subr.bf16.mxu0 %v1105
    %1449 = vmatpush1.bf16.msra.mxu0 %v1104
    %1450 = vmatprep.subr.bf16.mxu0 %v1101
    %1451 = vmatpush1.bf16.msra.mxu0 %v1100
    %1452 = vmatprep.subr.bf16.mxu0 %v1097
    %1453 = vmatpush1.bf16.msra.mxu0 %v1096
    %1454 = vmatprep.subr.bf16.mxu0 %v1093
    %1455 = vmatpush1.bf16.msra.mxu0 %v1092
    %1456 = vmatprep.subr.bf16.mxu0 %v1089
    %1457 = vmatpush1.bf16.msra.mxu0 %v1088
    %1458 = vmatprep.subr.bf16.mxu0 %v1149
    %1459 = vmatpush2.bf16.msra.mxu0 %v1148
    %1460 = vmatprep.subr.bf16.mxu0 %v1145
    %1461 = vmatpush2.bf16.msra.mxu0 %v1144
    %1462 = vmatprep.subr.bf16.mxu0 %v1141
    %1463 = vmatpush2.bf16.msra.mxu0 %v1140
    %1464 = vmatprep.subr.bf16.mxu0 %v1137
    %1465 = vmatpush2.bf16.msra.mxu0 %v1136
    %1466 = vmatprep.subr.bf16.mxu0 %v1133
    %1467 = vmatpush2.bf16.msra.mxu0 %v1132
    %1468 = vmatprep.subr.bf16.mxu0 %v1129
    %1469 = vmatpush2.bf16.msra.mxu0 %v1128
    %1470 = vmatprep.subr.bf16.mxu0 %v1125
    %1471 = vmatpush2.bf16.msra.mxu0 %v1124
    %1472 = vmatprep.subr.bf16.mxu0 %v1121
    %1473 = vmatpush2.bf16.msra.mxu0 %v1120
    %1474 = vmatprep.mubr.bf16.mxu0 %v152
    %1475 = vmatmul.mubr.bf16.gmra.mxu0 %v151
    %v1476 = vpop.f32.mrf.mxu0
    %v1477 = vadd.f32 %v1434, %v1476
    %v1478 = vpop.f32.mrf.mxu0
    %v1479 = vadd.f32 %v1436, %v1478
    %v1480 = vpop.f32.mrf.mxu0
    %v1481 = vadd.f32 %v1438, %v1480
    %v1482 = vpop.f32.mrf.mxu0
    %v1483 = vadd.f32 %v1440, %v1482
    %1484 = vdwg.mxu0
    %1485 = vmatprep.subr.bf16.mxu0 0
    %1486 = vmatpush1.bf16.msra.mxu0 0
    %1487 = vmatprep.subr.bf16.mxu0 0
    %1488 = vmatpush1.bf16.msra.mxu0 0
    %1489 = vmatprep.subr.bf16.mxu0 0
    %1490 = vmatpush1.bf16.msra.mxu0 0
    %1491 = vmatprep.subr.bf16.mxu0 0
    %1492 = vmatpush1.bf16.msra.mxu0 0
    %1493 = vmatprep.subr.bf16.mxu0 0
    %1494 = vmatpush1.bf16.msra.mxu0 0
    %1495 = vmatprep.subr.bf16.mxu0 0
    %1496 = vmatpush1.bf16.msra.mxu0 0
    %1497 = vmatprep.subr.bf16.mxu0 0
    %1498 = vmatpush1.bf16.msra.mxu0 0
    %1499 = vmatprep.subr.bf16.mxu0 %v1153
    %1500 = vmatpush1.bf16.msra.mxu0 %v1152
    %1501 = vmatprep.subr.bf16.mxu0 0
    %1502 = vmatpush2.bf16.msra.mxu0 0
    %1503 = vmatprep.subr.bf16.mxu0 0
    %1504 = vmatpush2.bf16.msra.mxu0 0
    %1505 = vmatprep.subr.bf16.mxu0 0
    %1506 = vmatpush2.bf16.msra.mxu0 0
    %1507 = vmatprep.subr.bf16.mxu0 0
    %1508 = vmatpush2.bf16.msra.mxu0 0
    %1509 = vmatprep.subr.bf16.mxu0 0
    %1510 = vmatpush2.bf16.msra.mxu0 0
    %1511 = vmatprep.subr.bf16.mxu0 0
    %1512 = vmatpush2.bf16.msra.mxu0 0
    %1513 = vmatprep.subr.bf16.mxu0 0
    %1514 = vmatpush2.bf16.msra.mxu0 0
    %1515 = vmatprep.subr.bf16.mxu0 0
    %1516 = vmatpush2.bf16.msra.mxu0 0
    %1517 = vmatprep.mubr.bf16.mxu0 0
    %1518 = vmatmul.mubr.bf16.gmra.mxu0 %v1354
    %v1519 = vpop.f32.mrf.mxu0
    %v1520 = vadd.f32 %v1477, %v1519
    %v1521 = vpop.f32.mrf.mxu0
    %v1522 = vadd.f32 %v1479, %v1521
    %v1523 = vpop.f32.mrf.mxu0
    %v1524 = vadd.f32 %v1481, %v1523
    %v1525 = vpop.f32.mrf.mxu0
    %v1526 = vadd.f32 %v1483, %v1525
    %1527 = vdwg.mxu0
    %1528 = vmatprep.subr.bf16.mxu0 %v991
    %1529 = vmatpush1.bf16.msra.mxu0 %v990
    %1530 = vmatprep.subr.bf16.mxu0 %v987
    %1531 = vmatpush1.bf16.msra.mxu0 %v986
    %1532 = vmatprep.subr.bf16.mxu0 %v983
    %1533 = vmatpush1.bf16.msra.mxu0 %v982
    %1534 = vmatprep.subr.bf16.mxu0 %v979
    %1535 = vmatpush1.bf16.msra.mxu0 %v978
    %1536 = vmatprep.subr.bf16.mxu0 %v975
    %1537 = vmatpush1.bf16.msra.mxu0 %v974
    %1538 = vmatprep.subr.bf16.mxu0 %v971
    %1539 = vmatpush1.bf16.msra.mxu0 %v970
    %1540 = vmatprep.subr.bf16.mxu0 %v967
    %1541 = vmatpush1.bf16.msra.mxu0 %v966
    %1542 = vmatprep.subr.bf16.mxu0 %v963
    %1543 = vmatpush1.bf16.msra.mxu0 %v962
    %1544 = vmatprep.subr.bf16.mxu0 %v1023
    %1545 = vmatpush2.bf16.msra.mxu0 %v1022
    %1546 = vmatprep.subr.bf16.mxu0 %v1019
    %1547 = vmatpush2.bf16.msra.mxu0 %v1018
    %1548 = vmatprep.subr.bf16.mxu0 %v1015
    %1549 = vmatpush2.bf16.msra.mxu0 %v1014
    %1550 = vmatprep.subr.bf16.mxu0 %v1011
    %1551 = vmatpush2.bf16.msra.mxu0 %v1010
    %1552 = vmatprep.subr.bf16.mxu0 %v1007
    %1553 = vmatpush2.bf16.msra.mxu0 %v1006
    %1554 = vmatprep.subr.bf16.mxu0 %v1003
    %1555 = vmatpush2.bf16.msra.mxu0 %v1002
    %1556 = vmatprep.subr.bf16.mxu0 %v999
    %1557 = vmatpush2.bf16.msra.mxu0 %v998
    %1558 = vmatprep.subr.bf16.mxu0 %v995
    %1559 = vmatpush2.bf16.msra.mxu0 %v994
    %1560 = vmatprep.mubr.bf16.mxu0 %v148
    %1561 = vmatmul.mubr.bf16.gmra.mxu0 %v147
    %v1562 = vpop.f32.mrf.mxu0
    %v1563 = vadd.f32 %v363, %v1562
    %v1564 = vpop.f32.mrf.mxu0
    %v1565 = vadd.f32 %v367, %v1564
    %v1566 = vpop.f32.mrf.mxu0
    %v1567 = vadd.f32 %v363, %v1566
    %v1568 = vpop.f32.mrf.mxu0
    %v1569 = vadd.f32 %v367, %v1568
    %1570 = vdwg.mxu0
    %1571 = vmatprep.subr.bf16.mxu0 %v1055
    %1572 = vmatpush1.bf16.msra.mxu0 %v1054
    %1573 = vmatprep.subr.bf16.mxu0 %v1051
    %1574 = vmatpush1.bf16.msra.mxu0 %v1050
    %1575 = vmatprep.subr.bf16.mxu0 %v1047
    %1576 = vmatpush1.bf16.msra.mxu0 %v1046
    %1577 = vmatprep.subr.bf16.mxu0 %v1043
    %1578 = vmatpush1.bf16.msra.mxu0 %v1042
    %1579 = vmatprep.subr.bf16.mxu0 %v1039
    %1580 = vmatpush1.bf16.msra.mxu0 %v1038
    %1581 = vmatprep.subr.bf16.mxu0 %v1035
    %1582 = vmatpush1.bf16.msra.mxu0 %v1034
    %1583 = vmatprep.subr.bf16.mxu0 %v1031
    %1584 = vmatpush1.bf16.msra.mxu0 %v1030
    %1585 = vmatprep.subr.bf16.mxu0 %v1027
    %1586 = vmatpush1.bf16.msra.mxu0 %v1026
    %1587 = vmatprep.subr.bf16.mxu0 %v1087
    %1588 = vmatpush2.bf16.msra.mxu0 %v1086
    %1589 = vmatprep.subr.bf16.mxu0 %v1083
    %1590 = vmatpush2.bf16.msra.mxu0 %v1082
    %1591 = vmatprep.subr.bf16.mxu0 %v1079
    %1592 = vmatpush2.bf16.msra.mxu0 %v1078
    %1593 = vmatprep.subr.bf16.mxu0 %v1075
    %1594 = vmatpush2.bf16.msra.mxu0 %v1074
    %1595 = vmatprep.subr.bf16.mxu0 %v1071
    %1596 = vmatpush2.bf16.msra.mxu0 %v1070
    %1597 = vmatprep.subr.bf16.mxu0 %v1067
    %1598 = vmatpush2.bf16.msra.mxu0 %v1066
    %1599 = vmatprep.subr.bf16.mxu0 %v1063
    %1600 = vmatpush2.bf16.msra.mxu0 %v1062
    %1601 = vmatprep.subr.bf16.mxu0 %v1059
    %1602 = vmatpush2.bf16.msra.mxu0 %v1058
    %1603 = vmatprep.mubr.bf16.mxu0 %v150
    %1604 = vmatmul.mubr.bf16.gmra.mxu0 %v149
    %v1605 = vpop.f32.mrf.mxu0
    %v1606 = vadd.f32 %v1563, %v1605
    %v1607 = vpop.f32.mrf.mxu0
    %v1608 = vadd.f32 %v1565, %v1607
    %v1609 = vpop.f32.mrf.mxu0
    %v1610 = vadd.f32 %v1567, %v1609
    %v1611 = vpop.f32.mrf.mxu0
    %v1612 = vadd.f32 %v1569, %v1611
    %1613 = vdwg.mxu0
    %1614 = vmatprep.subr.bf16.mxu0 %v1119
    %1615 = vmatpush1.bf16.msra.mxu0 %v1118
    %1616 = vmatprep.subr.bf16.mxu0 %v1115
    %1617 = vmatpush1.bf16.msra.mxu0 %v1114
    %1618 = vmatprep.subr.bf16.mxu0 %v1111
    %1619 = vmatpush1.bf16.msra.mxu0 %v1110
    %1620 = vmatprep.subr.bf16.mxu0 %v1107
    %1621 = vmatpush1.bf16.msra.mxu0 %v1106
    %1622 = vmatprep.subr.bf16.mxu0 %v1103
    %1623 = vmatpush1.bf16.msra.mxu0 %v1102
    %1624 = vmatprep.subr.bf16.mxu0 %v1099
    %1625 = vmatpush1.bf16.msra.mxu0 %v1098
    %1626 = vmatprep.subr.bf16.mxu0 %v1095
    %1627 = vmatpush1.bf16.msra.mxu0 %v1094
    %1628 = vmatprep.subr.bf16.mxu0 %v1091
    %1629 = vmatpush1.bf16.msra.mxu0 %v1090
    %1630 = vmatprep.subr.bf16.mxu0 %v1151
    %1631 = vmatpush2.bf16.msra.mxu0 %v1150
    %1632 = vmatprep.subr.bf16.mxu0 %v1147
    %1633 = vmatpush2.bf16.msra.mxu0 %v1146
    %1634 = vmatprep.subr.bf16.mxu0 %v1143
    %1635 = vmatpush2.bf16.msra.mxu0 %v1142
    %1636 = vmatprep.subr.bf16.mxu0 %v1139
    %1637 = vmatpush2.bf16.msra.mxu0 %v1138
    %1638 = vmatprep.subr.bf16.mxu0 %v1135
    %1639 = vmatpush2.bf16.msra.mxu0 %v1134
    %1640 = vmatprep.subr.bf16.mxu0 %v1131
    %1641 = vmatpush2.bf16.msra.mxu0 %v1130
    %1642 = vmatprep.subr.bf16.mxu0 %v1127
    %1643 = vmatpush2.bf16.msra.mxu0 %v1126
    %1644 = vmatprep.subr.bf16.mxu0 %v1123
    %1645 = vmatpush2.bf16.msra.mxu0 %v1122
    %1646 = vmatprep.mubr.bf16.mxu0 %v152
    %1647 = vmatmul.mubr.bf16.gmra.mxu0 %v151
    %v1648 = vpop.f32.mrf.mxu0
    %v1649 = vadd.f32 %v1606, %v1648
    %v1650 = vpop.f32.mrf.mxu0
    %v1651 = vadd.f32 %v1608, %v1650
    %v1652 = vpop.f32.mrf.mxu0
    %v1653 = vadd.f32 %v1610, %v1652
    %v1654 = vpop.f32.mrf.mxu0
    %v1655 = vadd.f32 %v1612, %v1654
    %1656 = vdwg.mxu0
    %1657 = vmatprep.subr.bf16.mxu0 0
    %1658 = vmatpush1.bf16.msra.mxu0 0
    %1659 = vmatprep.subr.bf16.mxu0 0
    %1660 = vmatpush1.bf16.msra.mxu0 0
    %1661 = vmatprep.subr.bf16.mxu0 0
    %1662 = vmatpush1.bf16.msra.mxu0 0
    %1663 = vmatprep.subr.bf16.mxu0 0
    %1664 = vmatpush1.bf16.msra.mxu0 0
    %1665 = vmatprep.subr.bf16.mxu0 0
    %1666 = vmatpush1.bf16.msra.mxu0 0
    %1667 = vmatprep.subr.bf16.mxu0 0
    %1668 = vmatpush1.bf16.msra.mxu0 0
    %1669 = vmatprep.subr.bf16.mxu0 0
    %1670 = vmatpush1.bf16.msra.mxu0 0
    %1671 = vmatprep.subr.bf16.mxu0 %v1155
    %1672 = vmatpush1.bf16.msra.mxu0 %v1154
    %1673 = vmatprep.subr.bf16.mxu0 0
    %1674 = vmatpush2.bf16.msra.mxu0 0
    %1675 = vmatprep.subr.bf16.mxu0 0
    %1676 = vmatpush2.bf16.msra.mxu0 0
    %1677 = vmatprep.subr.bf16.mxu0 0
    %1678 = vmatpush2.bf16.msra.mxu0 0
    %1679 = vmatprep.subr.bf16.mxu0 0
    %1680 = vmatpush2.bf16.msra.mxu0 0
    %1681 = vmatprep.subr.bf16.mxu0 0
    %1682 = vmatpush2.bf16.msra.mxu0 0
    %1683 = vmatprep.subr.bf16.mxu0 0
    %1684 = vmatpush2.bf16.msra.mxu0 0
    %1685 = vmatprep.subr.bf16.mxu0 0
    %1686 = vmatpush2.bf16.msra.mxu0 0
    %1687 = vmatprep.subr.bf16.mxu0 0
    %1688 = vmatpush2.bf16.msra.mxu0 0
    %1689 = vmatprep.mubr.bf16.mxu0 0
    %1690 = vmatmul.mubr.bf16.gmra.mxu0 %v1354
    %v1691 = vpop.f32.mrf.mxu0
    %v1692 = vadd.f32 %v1649, %v1691
    %v1693 = vpop.f32.mrf.mxu0
    %v1694 = vadd.f32 %v1651, %v1693
    %v1695 = vpop.f32.mrf.mxu0
    %v1696 = vadd.f32 %v1653, %v1695
    %v1697 = vpop.f32.mrf.mxu0
    %v1698 = vadd.f32 %v1655, %v1697
    %1699 = vdwg.mxu0
    %v1700 = vmul.f32 %v1520, 0.01
    %v1701 = vmul.f32 %v1522, 0.01
    %v1702 = vmul.f32 %v1692, 0.01
    %v1703 = vmul.f32 %v1694, 0.01
    %v1704 = vmul.f32 %v1524, 0.01
    %v1705 = vmul.f32 %v1526, 0.01
    %v1706 = vmul.f32 %v1696, 0.01
    %v1707 = vmul.f32 %v1698, 0.01
    %v1708 = vmax.f32 %v1520, %v1700
    %v1709 = vmax.f32 %v1522, %v1701
    %v1710 = vmax.f32 %v1692, %v1702
    %v1711 = vmax.f32 %v1694, %v1703
    %v1712 = vmax.f32 %v1524, %v1704
    %v1713 = vmax.f32 %v1526, %v1705
    %v1714 = vmax.f32 %v1696, %v1706
    %v1715 = vmax.f32 %v1698, %v1707
    %v1716 = vpack.c.bf16 %v1712, %v1708
    %v1717 = vpack.c.bf16 %v1713, %v1709
    %v1718 = vpack.c.bf16 %v1714, %v1710
    %v1719 = vpack.c.bf16 %v1715, %v1711
    %v1720 = vld [vmem:[#allocation8] sm:$0xff]
    %v1721 = vld [vmem:[#allocation8 + $0x8] sm:$0xff]
    %v1722 = vld [vmem:[#allocation8 + $0x10] sm:$0xff]
    %v1723 = vld [vmem:[#allocation8 + $0x18] sm:$0xff]
    %v1724 = vld [vmem:[#allocation8 + $0x20] sm:$0xff]
    %v1725 = vld [vmem:[#allocation8 + $0x28] sm:$0xff]
    %v1726 = vld [vmem:[#allocation8 + $0x30] sm:$0xff]
    %v1727 = vld [vmem:[#allocation8 + $0x38] sm:$0xff]
    %v1728 = vld [vmem:[#allocation8 + $0x40] sm:$0xff]
    %v1729 = vld [vmem:[#allocation8 + $0x48] sm:$0xff]
    %v1730 = vld [vmem:[#allocation8 + $0x50] sm:$0xff]
    %v1731 = vld [vmem:[#allocation8 + $0x58] sm:$0xff]
    %v1732 = vld [vmem:[#allocation8 + $0x60] sm:$0xff]
    %v1733 = vld [vmem:[#allocation8 + $0x68] sm:$0xff]
    %v1734 = vld [vmem:[#allocation8 + $0x70] sm:$0xff]
    %v1735 = vld [vmem:[#allocation8 + $0x78] sm:$0xff]
    %v1736 = vld [vmem:[#allocation8 + $0x80] sm:$0xff]
    %v1737 = vld [vmem:[#allocation8 + $0x88] sm:$0xff]
    %v1738 = vld [vmem:[#allocation8 + $0x90] sm:$0xff]
    %v1739 = vld [vmem:[#allocation8 + $0x98] sm:$0xff]
    %v1740 = vld [vmem:[#allocation8 + $0xa0] sm:$0xff]
    %v1741 = vld [vmem:[#allocation8 + $0xa8] sm:$0xff]
    %v1742 = vld [vmem:[#allocation8 + $0xb0] sm:$0xff]
    %v1743 = vld [vmem:[#allocation8 + $0xb8] sm:$0xff]
    %v1744 = vld [vmem:[#allocation8 + $0xc0] sm:$0xff]
    %v1745 = vld [vmem:[#allocation8 + $0xc8] sm:$0xff]
    %v1746 = vld [vmem:[#allocation8 + $0xd0] sm:$0xff]
    %v1747 = vld [vmem:[#allocation8 + $0xd8] sm:$0xff]
    %v1748 = vld [vmem:[#allocation8 + $0xe0] sm:$0xff]
    %v1749 = vld [vmem:[#allocation8 + $0xe8] sm:$0xff]
    %v1750 = vld [vmem:[#allocation8 + $0xf0] sm:$0xff]
    %v1751 = vld [vmem:[#allocation8 + $0xf8] sm:$0xff]
    %v1752 = vld [vmem:[#allocation8 + $0x100] sm:$0xff]
    %v1753 = vld [vmem:[#allocation8 + $0x108] sm:$0xff]
    %v1754 = vld [vmem:[#allocation8 + $0x110] sm:$0xff]
    %v1755 = vld [vmem:[#allocation8 + $0x118] sm:$0xff]
    %v1756 = vld [vmem:[#allocation8 + $0x120] sm:$0xff]
    %v1757 = vld [vmem:[#allocation8 + $0x128] sm:$0xff]
    %v1758 = vld [vmem:[#allocation8 + $0x130] sm:$0xff]
    %v1759 = vld [vmem:[#allocation8 + $0x138] sm:$0xff]
    %v1760 = vld [vmem:[#allocation8 + $0x140] sm:$0xff]
    %v1761 = vld [vmem:[#allocation8 + $0x148] sm:$0xff]
    %v1762 = vld [vmem:[#allocation8 + $0x150] sm:$0xff]
    %v1763 = vld [vmem:[#allocation8 + $0x158] sm:$0xff]
    %v1764 = vld [vmem:[#allocation8 + $0x160] sm:$0xff]
    %v1765 = vld [vmem:[#allocation8 + $0x168] sm:$0xff]
    %v1766 = vld [vmem:[#allocation8 + $0x170] sm:$0xff]
    %v1767 = vld [vmem:[#allocation8 + $0x178] sm:$0xff]
    %v1768 = vld [vmem:[#allocation8 + $0x180] sm:$0xff]
    %v1769 = vld [vmem:[#allocation8 + $0x188] sm:$0xff]
    %v1770 = vld [vmem:[#allocation8 + $0x190] sm:$0xff]
    %v1771 = vld [vmem:[#allocation8 + $0x198] sm:$0xff]
    %v1772 = vld [vmem:[#allocation8 + $0x1a0] sm:$0xff]
    %v1773 = vld [vmem:[#allocation8 + $0x1a8] sm:$0xff]
    %v1774 = vld [vmem:[#allocation8 + $0x1b0] sm:$0xff]
    %v1775 = vld [vmem:[#allocation8 + $0x1b8] sm:$0xff]
    %v1776 = vld [vmem:[#allocation8 + $0x1c0] sm:$0xff]
    %v1777 = vld [vmem:[#allocation8 + $0x1c8] sm:$0xff]
    %v1778 = vld [vmem:[#allocation8 + $0x1d0] sm:$0xff]
    %v1779 = vld [vmem:[#allocation8 + $0x1d8] sm:$0xff]
    %v1780 = vld [vmem:[#allocation8 + $0x1e0] sm:$0xff]
    %v1781 = vld [vmem:[#allocation8 + $0x1e8] sm:$0xff]
    %v1782 = vld [vmem:[#allocation8 + $0x1f0] sm:$0xff]
    %v1783 = vld [vmem:[#allocation8 + $0x1f8] sm:$0xff]
    %v1784 = vld [vmem:[%s4] sm:$0x3]
    %v1786 = vlaneseq
    %v1787 = vshrl.u32 %v1786, 7
    %v1788 = vsub.s32 0, %v1787
    %v1789 = vrot.slane %v1784, %v1788
    %v1790 = vlaneseq
    %v1791 = vshrl.u32 %v1790, 7
    %v1792 = vsub.s32 1, %v1791
    %v1793 = vrot.slane %v1784, %v1792
    %v1860 = vunpack.c.l.b16 %v1720
    %v1861 = vunpack.c.h.b16 %v1720
    %v1862 = vunpack.c.l.b16 %v1721
    %v1863 = vunpack.c.h.b16 %v1721
    %v1864 = vunpack.c.l.b16 %v1722
    %v1865 = vunpack.c.h.b16 %v1722
    %v1866 = vunpack.c.l.b16 %v1723
    %v1867 = vunpack.c.h.b16 %v1723
    %v1868 = vunpack.c.l.b16 %v1724
    %v1869 = vunpack.c.h.b16 %v1724
    %v1870 = vunpack.c.l.b16 %v1725
    %v1871 = vunpack.c.h.b16 %v1725
    %v1872 = vunpack.c.l.b16 %v1726
    %v1873 = vunpack.c.h.b16 %v1726
    %v1874 = vunpack.c.l.b16 %v1727
    %v1875 = vunpack.c.h.b16 %v1727
    %v1876 = vunpack.c.l.b16 %v1728
    %v1877 = vunpack.c.h.b16 %v1728
    %v1878 = vunpack.c.l.b16 %v1729
    %v1879 = vunpack.c.h.b16 %v1729
    %v1880 = vunpack.c.l.b16 %v1730
    %v1881 = vunpack.c.h.b16 %v1730
    %v1882 = vunpack.c.l.b16 %v1731
    %v1883 = vunpack.c.h.b16 %v1731
    %v1884 = vunpack.c.l.b16 %v1732
    %v1885 = vunpack.c.h.b16 %v1732
    %v1886 = vunpack.c.l.b16 %v1733
    %v1887 = vunpack.c.h.b16 %v1733
    %v1888 = vunpack.c.l.b16 %v1734
    %v1889 = vunpack.c.h.b16 %v1734
    %v1890 = vunpack.c.l.b16 %v1735
    %v1891 = vunpack.c.h.b16 %v1735
    %v1892 = vunpack.c.l.b16 %v1736
    %v1893 = vunpack.c.h.b16 %v1736
    %v1894 = vunpack.c.l.b16 %v1737
    %v1895 = vunpack.c.h.b16 %v1737
    %v1896 = vunpack.c.l.b16 %v1738
    %v1897 = vunpack.c.h.b16 %v1738
    %v1898 = vunpack.c.l.b16 %v1739
    %v1899 = vunpack.c.h.b16 %v1739
    %v1900 = vunpack.c.l.b16 %v1740
    %v1901 = vunpack.c.h.b16 %v1740
    %v1902 = vunpack.c.l.b16 %v1741
    %v1903 = vunpack.c.h.b16 %v1741
    %v1904 = vunpack.c.l.b16 %v1742
    %v1905 = vunpack.c.h.b16 %v1742
    %v1906 = vunpack.c.l.b16 %v1743
    %v1907 = vunpack.c.h.b16 %v1743
    %v1908 = vunpack.c.l.b16 %v1744
    %v1909 = vunpack.c.h.b16 %v1744
    %v1910 = vunpack.c.l.b16 %v1745
    %v1911 = vunpack.c.h.b16 %v1745
    %v1912 = vunpack.c.l.b16 %v1746
    %v1913 = vunpack.c.h.b16 %v1746
    %v1914 = vunpack.c.l.b16 %v1747
    %v1915 = vunpack.c.h.b16 %v1747
    %v1916 = vunpack.c.l.b16 %v1748
    %v1917 = vunpack.c.h.b16 %v1748
    %v1918 = vunpack.c.l.b16 %v1749
    %v1919 = vunpack.c.h.b16 %v1749
    %v1920 = vunpack.c.l.b16 %v1750
    %v1921 = vunpack.c.h.b16 %v1750
    %v1922 = vunpack.c.l.b16 %v1751
    %v1923 = vunpack.c.h.b16 %v1751
    %v1924 = vunpack.c.l.b16 %v1752
    %v1925 = vunpack.c.h.b16 %v1752
    %v1926 = vunpack.c.l.b16 %v1753
    %v1927 = vunpack.c.h.b16 %v1753
    %v1928 = vunpack.c.l.b16 %v1754
    %v1929 = vunpack.c.h.b16 %v1754
    %v1930 = vunpack.c.l.b16 %v1755
    %v1931 = vunpack.c.h.b16 %v1755
    %v1932 = vunpack.c.l.b16 %v1756
    %v1933 = vunpack.c.h.b16 %v1756
    %v1934 = vunpack.c.l.b16 %v1757
    %v1935 = vunpack.c.h.b16 %v1757
    %v1936 = vunpack.c.l.b16 %v1758
    %v1937 = vunpack.c.h.b16 %v1758
    %v1938 = vunpack.c.l.b16 %v1759
    %v1939 = vunpack.c.h.b16 %v1759
    %v1940 = vunpack.c.l.b16 %v1760
    %v1941 = vunpack.c.h.b16 %v1760
    %v1942 = vunpack.c.l.b16 %v1761
    %v1943 = vunpack.c.h.b16 %v1761
    %v1944 = vunpack.c.l.b16 %v1762
    %v1945 = vunpack.c.h.b16 %v1762
    %v1946 = vunpack.c.l.b16 %v1763
    %v1947 = vunpack.c.h.b16 %v1763
    %v1948 = vunpack.c.l.b16 %v1764
    %v1949 = vunpack.c.h.b16 %v1764
    %v1950 = vunpack.c.l.b16 %v1765
    %v1951 = vunpack.c.h.b16 %v1765
    %v1952 = vunpack.c.l.b16 %v1766
    %v1953 = vunpack.c.h.b16 %v1766
    %v1954 = vunpack.c.l.b16 %v1767
    %v1955 = vunpack.c.h.b16 %v1767
    %v1956 = vunpack.c.l.b16 %v1768
    %v1957 = vunpack.c.h.b16 %v1768
    %v1958 = vunpack.c.l.b16 %v1769
    %v1959 = vunpack.c.h.b16 %v1769
    %v1960 = vunpack.c.l.b16 %v1770
    %v1961 = vunpack.c.h.b16 %v1770
    %v1962 = vunpack.c.l.b16 %v1771
    %v1963 = vunpack.c.h.b16 %v1771
    %v1964 = vunpack.c.l.b16 %v1772
    %v1965 = vunpack.c.h.b16 %v1772
    %v1966 = vunpack.c.l.b16 %v1773
    %v1967 = vunpack.c.h.b16 %v1773
    %v1968 = vunpack.c.l.b16 %v1774
    %v1969 = vunpack.c.h.b16 %v1774
    %v1970 = vunpack.c.l.b16 %v1775
    %v1971 = vunpack.c.h.b16 %v1775
    %v1972 = vunpack.c.l.b16 %v1776
    %v1973 = vunpack.c.h.b16 %v1776
    %v1974 = vunpack.c.l.b16 %v1777
    %v1975 = vunpack.c.h.b16 %v1777
    %v1976 = vunpack.c.l.b16 %v1778
    %v1977 = vunpack.c.h.b16 %v1778
    %v1978 = vunpack.c.l.b16 %v1779
    %v1979 = vunpack.c.h.b16 %v1779
    %v1980 = vunpack.c.l.b16 %v1780
    %v1981 = vunpack.c.h.b16 %v1780
    %v1982 = vunpack.c.l.b16 %v1781
    %v1983 = vunpack.c.h.b16 %v1781
    %v1984 = vunpack.c.l.b16 %v1782
    %v1985 = vunpack.c.h.b16 %v1782
    %v1986 = vunpack.c.l.b16 %v1783
    %v1987 = vunpack.c.h.b16 %v1783
    %v1988 = vpack.c.b16 %v1862, %v1860
    %v1989 = vpack.c.b16 %v1863, %v1861
    %v1990 = vpack.c.b16 %v1866, %v1864
    %v1991 = vpack.c.b16 %v1867, %v1865
    %v1992 = vpack.c.b16 %v1870, %v1868
    %v1993 = vpack.c.b16 %v1871, %v1869
    %v1994 = vpack.c.b16 %v1874, %v1872
    %v1995 = vpack.c.b16 %v1875, %v1873
    %v1996 = vpack.c.b16 %v1878, %v1876
    %v1997 = vpack.c.b16 %v1879, %v1877
    %v1998 = vpack.c.b16 %v1882, %v1880
    %v1999 = vpack.c.b16 %v1883, %v1881
    %v2000 = vpack.c.b16 %v1886, %v1884
    %v2001 = vpack.c.b16 %v1887, %v1885
    %v2002 = vpack.c.b16 %v1890, %v1888
    %v2003 = vpack.c.b16 %v1891, %v1889
    %v2004 = vpack.c.b16 %v1894, %v1892
    %v2005 = vpack.c.b16 %v1895, %v1893
    %v2006 = vpack.c.b16 %v1898, %v1896
    %v2007 = vpack.c.b16 %v1899, %v1897
    %v2008 = vpack.c.b16 %v1902, %v1900
    %v2009 = vpack.c.b16 %v1903, %v1901
    %v2010 = vpack.c.b16 %v1906, %v1904
    %v2011 = vpack.c.b16 %v1907, %v1905
    %v2012 = vpack.c.b16 %v1910, %v1908
    %v2013 = vpack.c.b16 %v1911, %v1909
    %v2014 = vpack.c.b16 %v1914, %v1912
    %v2015 = vpack.c.b16 %v1915, %v1913
    %v2016 = vpack.c.b16 %v1918, %v1916
    %v2017 = vpack.c.b16 %v1919, %v1917
    %v2018 = vpack.c.b16 %v1922, %v1920
    %v2019 = vpack.c.b16 %v1923, %v1921
    %v2020 = vpack.c.b16 %v1926, %v1924
    %v2021 = vpack.c.b16 %v1927, %v1925
    %v2022 = vpack.c.b16 %v1930, %v1928
    %v2023 = vpack.c.b16 %v1931, %v1929
    %v2024 = vpack.c.b16 %v1934, %v1932
    %v2025 = vpack.c.b16 %v1935, %v1933
    %v2026 = vpack.c.b16 %v1938, %v1936
    %v2027 = vpack.c.b16 %v1939, %v1937
    %v2028 = vpack.c.b16 %v1942, %v1940
    %v2029 = vpack.c.b16 %v1943, %v1941
    %v2030 = vpack.c.b16 %v1946, %v1944
    %v2031 = vpack.c.b16 %v1947, %v1945
    %v2032 = vpack.c.b16 %v1950, %v1948
    %v2033 = vpack.c.b16 %v1951, %v1949
    %v2034 = vpack.c.b16 %v1954, %v1952
    %v2035 = vpack.c.b16 %v1955, %v1953
    %v2036 = vpack.c.b16 %v1958, %v1956
    %v2037 = vpack.c.b16 %v1959, %v1957
    %v2038 = vpack.c.b16 %v1962, %v1960
    %v2039 = vpack.c.b16 %v1963, %v1961
    %v2040 = vpack.c.b16 %v1966, %v1964
    %v2041 = vpack.c.b16 %v1967, %v1965
    %v2042 = vpack.c.b16 %v1970, %v1968
    %v2043 = vpack.c.b16 %v1971, %v1969
    %v2044 = vpack.c.b16 %v1974, %v1972
    %v2045 = vpack.c.b16 %v1975, %v1973
    %v2046 = vpack.c.b16 %v1978, %v1976
    %v2047 = vpack.c.b16 %v1979, %v1977
    %v2048 = vpack.c.b16 %v1982, %v1980
    %v2049 = vpack.c.b16 %v1983, %v1981
    %v2050 = vpack.c.b16 %v1986, %v1984
    %v2051 = vpack.c.b16 %v1987, %v1985
    %2116 = vmatprep.subr.bf16.mxu0 %v2003
    %2117 = vmatpush1.bf16.msra.mxu0 %v2002
    %2118 = vmatprep.subr.bf16.mxu0 %v2001
    %2119 = vmatpush1.bf16.msra.mxu0 %v2000
    %2120 = vmatprep.subr.bf16.mxu0 %v1999
    %2121 = vmatpush1.bf16.msra.mxu0 %v1998
    %2122 = vmatprep.subr.bf16.mxu0 %v1997
    %2123 = vmatpush1.bf16.msra.mxu0 %v1996
    %2124 = vmatprep.subr.bf16.mxu0 %v1995
    %2125 = vmatpush1.bf16.msra.mxu0 %v1994
    %2126 = vmatprep.subr.bf16.mxu0 %v1993
    %2127 = vmatpush1.bf16.msra.mxu0 %v1992
    %2128 = vmatprep.subr.bf16.mxu0 %v1991
    %2129 = vmatpush1.bf16.msra.mxu0 %v1990
    %2130 = vmatprep.subr.bf16.mxu0 %v1989
    %2131 = vmatpush1.bf16.msra.mxu0 %v1988
    %2132 = vmatprep.subr.bf16.mxu0 %v2019
    %2133 = vmatpush2.bf16.msra.mxu0 %v2018
    %2134 = vmatprep.subr.bf16.mxu0 %v2017
    %2135 = vmatpush2.bf16.msra.mxu0 %v2016
    %2136 = vmatprep.subr.bf16.mxu0 %v2015
    %2137 = vmatpush2.bf16.msra.mxu0 %v2014
    %2138 = vmatprep.subr.bf16.mxu0 %v2013
    %2139 = vmatpush2.bf16.msra.mxu0 %v2012
    %2140 = vmatprep.subr.bf16.mxu0 %v2011
    %2141 = vmatpush2.bf16.msra.mxu0 %v2010
    %2142 = vmatprep.subr.bf16.mxu0 %v2009
    %2143 = vmatpush2.bf16.msra.mxu0 %v2008
    %2144 = vmatprep.subr.bf16.mxu0 %v2007
    %2145 = vmatpush2.bf16.msra.mxu0 %v2006
    %2146 = vmatprep.subr.bf16.mxu0 %v2005
    %2147 = vmatpush2.bf16.msra.mxu0 %v2004
    %2148 = vmatprep.mubr.bf16.mxu0 %v1717
    %2149 = vmatmul.mubr.bf16.gmra.mxu0 %v1716
    %v2150 = vpop.f32.mrf.mxu0
    %v2151 = vadd.f32 %v1789, %v2150
    %v2152 = vpop.f32.mrf.mxu0
    %v2153 = vadd.f32 %v1793, %v2152
    %v2154 = vpop.f32.mrf.mxu0
    %v2155 = vadd.f32 %v1789, %v2154
    %v2156 = vpop.f32.mrf.mxu0
    %v2157 = vadd.f32 %v1793, %v2156
    %2158 = vdwg.mxu0
    %2159 = vmatprep.subr.bf16.mxu0 %v2035
    %2160 = vmatpush1.bf16.msra.mxu0 %v2034
    %2161 = vmatprep.subr.bf16.mxu0 %v2033
    %2162 = vmatpush1.bf16.msra.mxu0 %v2032
    %2163 = vmatprep.subr.bf16.mxu0 %v2031
    %2164 = vmatpush1.bf16.msra.mxu0 %v2030
    %2165 = vmatprep.subr.bf16.mxu0 %v2029
    %2166 = vmatpush1.bf16.msra.mxu0 %v2028
    %2167 = vmatprep.subr.bf16.mxu0 %v2027
    %2168 = vmatpush1.bf16.msra.mxu0 %v2026
    %2169 = vmatprep.subr.bf16.mxu0 %v2025
    %2170 = vmatpush1.bf16.msra.mxu0 %v2024
    %2171 = vmatprep.subr.bf16.mxu0 %v2023
    %2172 = vmatpush1.bf16.msra.mxu0 %v2022
    %2173 = vmatprep.subr.bf16.mxu0 %v2021
    %2174 = vmatpush1.bf16.msra.mxu0 %v2020
    %2175 = vmatprep.subr.bf16.mxu0 %v2051
    %2176 = vmatpush2.bf16.msra.mxu0 %v2050
    %2177 = vmatprep.subr.bf16.mxu0 %v2049
    %2178 = vmatpush2.bf16.msra.mxu0 %v2048
    %2179 = vmatprep.subr.bf16.mxu0 %v2047
    %2180 = vmatpush2.bf16.msra.mxu0 %v2046
    %2181 = vmatprep.subr.bf16.mxu0 %v2045
    %2182 = vmatpush2.bf16.msra.mxu0 %v2044
    %2183 = vmatprep.subr.bf16.mxu0 %v2043
    %2184 = vmatpush2.bf16.msra.mxu0 %v2042
    %2185 = vmatprep.subr.bf16.mxu0 %v2041
    %2186 = vmatpush2.bf16.msra.mxu0 %v2040
    %2187 = vmatprep.subr.bf16.mxu0 %v2039
    %2188 = vmatpush2.bf16.msra.mxu0 %v2038
    %2189 = vmatprep.subr.bf16.mxu0 %v2037
    %2190 = vmatpush2.bf16.msra.mxu0 %v2036
    %2191 = vmatprep.mubr.bf16.mxu0 %v1719
    %2192 = vmatmul.mubr.bf16.gmra.mxu0 %v1718
    %v2193 = vpop.f32.mrf.mxu0
    %v2194 = vadd.f32 %v2151, %v2193
    %v2195 = vpop.f32.mrf.mxu0
    %v2196 = vadd.f32 %v2153, %v2195
    %v2197 = vpop.f32.mrf.mxu0
    %v2198 = vadd.f32 %v2155, %v2197
    %v2199 = vpop.f32.mrf.mxu0
    %v2200 = vadd.f32 %v2157, %v2199
    %2201 = vdwg.mxu0
    %v2202 = vmul.f32 %v2194, 0.01
    %v2203 = vmul.f32 %v2196, 0.01
    %v2204 = vmul.f32 %v2198, 0.01
    %v2205 = vmul.f32 %v2200, 0.01
    %v2206 = vmax.f32 %v2194, %v2202
    %v2207 = vmax.f32 %v2196, %v2203
    %v2208 = vmax.f32 %v2198, %v2204
    %v2209 = vmax.f32 %v2200, %v2205
    %v2210 = vpack.c.bf16 %v2208, %v2206
    %v2211 = vpack.c.bf16 %v2209, %v2207
    %v2212 = vld [vmem:[#allocation10] sm:$0xf]
    %v2213 = vld [vmem:[#allocation10 + $0x4] sm:$0xf]
    %v2214 = vld [vmem:[#allocation10 + $0x8] sm:$0xf]
    %v2215 = vld [vmem:[#allocation10 + $0xc] sm:$0xf]
    %v2216 = vld [vmem:[#allocation10 + $0x10] sm:$0xf]
    %v2217 = vld [vmem:[#allocation10 + $0x14] sm:$0xf]
    %v2218 = vld [vmem:[#allocation10 + $0x18] sm:$0xf]
    %v2219 = vld [vmem:[#allocation10 + $0x1c] sm:$0xf]
    %v2220 = vld [vmem:[#allocation10 + $0x20] sm:$0xf]
    %v2221 = vld [vmem:[#allocation10 + $0x24] sm:$0xf]
    %v2222 = vld [vmem:[#allocation10 + $0x28] sm:$0xf]
    %v2223 = vld [vmem:[#allocation10 + $0x2c] sm:$0xf]
    %v2224 = vld [vmem:[#allocation10 + $0x30] sm:$0xf]
    %v2225 = vld [vmem:[#allocation10 + $0x34] sm:$0xf]
    %v2226 = vld [vmem:[#allocation10 + $0x38] sm:$0xf]
    %v2227 = vld [vmem:[#allocation10 + $0x3c] sm:$0xf]
    %v2228 = vld [vmem:[#allocation10 + $0x40] sm:$0xf]
    %v2229 = vld [vmem:[#allocation10 + $0x44] sm:$0xf]
    %v2230 = vld [vmem:[#allocation10 + $0x48] sm:$0xf]
    %v2231 = vld [vmem:[#allocation10 + $0x4c] sm:$0xf]
    %v2232 = vld [vmem:[#allocation10 + $0x50] sm:$0xf]
    %v2233 = vld [vmem:[#allocation10 + $0x54] sm:$0xf]
    %v2234 = vld [vmem:[#allocation10 + $0x58] sm:$0xf]
    %v2235 = vld [vmem:[#allocation10 + $0x5c] sm:$0xf]
    %v2236 = vld [vmem:[#allocation10 + $0x60] sm:$0xf]
    %v2237 = vld [vmem:[#allocation10 + $0x64] sm:$0xf]
    %v2238 = vld [vmem:[#allocation10 + $0x68] sm:$0xf]
    %v2239 = vld [vmem:[#allocation10 + $0x6c] sm:$0xf]
    %v2240 = vld [vmem:[#allocation10 + $0x70] sm:$0xf]
    %v2241 = vld [vmem:[#allocation10 + $0x74] sm:$0xf]
    %v2242 = vld [vmem:[#allocation10 + $0x78] sm:$0xf]
    %v2243 = vld [vmem:[#allocation10 + $0x7c] sm:$0xf]
    %v2244 = vld [vmem:[%s6] sm:$0x1]
    %v2246 = vlaneseq
    %v2247 = vshrl.u32 %v2246, 7
    %v2248 = vsub.s32 0, %v2247
    %v2249 = vrot.slane %v2244, %v2248
    %v2283 = vunpack.c.l.b16 %v2212
    %v2284 = vunpack.c.l.b16 %v2213
    %v2285 = vunpack.c.l.b16 %v2214
    %v2286 = vunpack.c.l.b16 %v2215
    %v2287 = vunpack.c.l.b16 %v2216
    %v2288 = vunpack.c.l.b16 %v2217
    %v2289 = vunpack.c.l.b16 %v2218
    %v2290 = vunpack.c.l.b16 %v2219
    %v2291 = vunpack.c.l.b16 %v2220
    %v2292 = vunpack.c.l.b16 %v2221
    %v2293 = vunpack.c.l.b16 %v2222
    %v2294 = vunpack.c.l.b16 %v2223
    %v2295 = vunpack.c.l.b16 %v2224
    %v2296 = vunpack.c.l.b16 %v2225
    %v2297 = vunpack.c.l.b16 %v2226
    %v2298 = vunpack.c.l.b16 %v2227
    %v2299 = vunpack.c.l.b16 %v2228
    %v2300 = vunpack.c.l.b16 %v2229
    %v2301 = vunpack.c.l.b16 %v2230
    %v2302 = vunpack.c.l.b16 %v2231
    %v2303 = vunpack.c.l.b16 %v2232
    %v2304 = vunpack.c.l.b16 %v2233
    %v2305 = vunpack.c.l.b16 %v2234
    %v2306 = vunpack.c.l.b16 %v2235
    %v2307 = vunpack.c.l.b16 %v2236
    %v2308 = vunpack.c.l.b16 %v2237
    %v2309 = vunpack.c.l.b16 %v2238
    %v2310 = vunpack.c.l.b16 %v2239
    %v2311 = vunpack.c.l.b16 %v2240
    %v2312 = vunpack.c.l.b16 %v2241
    %v2313 = vunpack.c.l.b16 %v2242
    %v2314 = vunpack.c.l.b16 %v2243
    %v2315 = vpack.c.b16 %v2284, %v2283
    %v2316 = vpack.c.b16 %v2286, %v2285
    %v2317 = vpack.c.b16 %v2288, %v2287
    %v2318 = vpack.c.b16 %v2290, %v2289
    %v2319 = vpack.c.b16 %v2292, %v2291
    %v2320 = vpack.c.b16 %v2294, %v2293
    %v2321 = vpack.c.b16 %v2296, %v2295
    %v2322 = vpack.c.b16 %v2298, %v2297
    %v2323 = vpack.c.b16 %v2300, %v2299
    %v2324 = vpack.c.b16 %v2302, %v2301
    %v2325 = vpack.c.b16 %v2304, %v2303
    %v2326 = vpack.c.b16 %v2306, %v2305
    %v2327 = vpack.c.b16 %v2308, %v2307
    %v2328 = vpack.c.b16 %v2310, %v2309
    %v2329 = vpack.c.b16 %v2312, %v2311
    %v2330 = vpack.c.b16 %v2314, %v2313
    %2347 = vmatprep.subr.bf16.mxu0 0
    %2348 = vmatpush1.bf16.msra.mxu0 %v2322
    %2349 = vmatprep.subr.bf16.mxu0 0
    %2350 = vmatpush1.bf16.msra.mxu0 %v2321
    %2351 = vmatprep.subr.bf16.mxu0 0
    %2352 = vmatpush1.bf16.msra.mxu0 %v2320
    %2353 = vmatprep.subr.bf16.mxu0 0
    %2354 = vmatpush1.bf16.msra.mxu0 %v2319
    %2355 = vmatprep.subr.bf16.mxu0 0
    %2356 = vmatpush1.bf16.msra.mxu0 %v2318
    %2357 = vmatprep.subr.bf16.mxu0 0
    %2358 = vmatpush1.bf16.msra.mxu0 %v2317
    %2359 = vmatprep.subr.bf16.mxu0 0
    %2360 = vmatpush1.bf16.msra.mxu0 %v2316
    %2361 = vmatprep.subr.bf16.mxu0 0
    %2362 = vmatpush1.bf16.msra.mxu0 %v2315
    %2363 = vmatprep.subr.bf16.mxu0 0
    %2364 = vmatpush2.bf16.msra.mxu0 %v2330
    %2365 = vmatprep.subr.bf16.mxu0 0
    %2366 = vmatpush2.bf16.msra.mxu0 %v2329
    %2367 = vmatprep.subr.bf16.mxu0 0
    %2368 = vmatpush2.bf16.msra.mxu0 %v2328
    %2369 = vmatprep.subr.bf16.mxu0 0
    %2370 = vmatpush2.bf16.msra.mxu0 %v2327
    %2371 = vmatprep.subr.bf16.mxu0 0
    %2372 = vmatpush2.bf16.msra.mxu0 %v2326
    %2373 = vmatprep.subr.bf16.mxu0 0
    %2374 = vmatpush2.bf16.msra.mxu0 %v2325
    %2375 = vmatprep.subr.bf16.mxu0 0
    %2376 = vmatpush2.bf16.msra.mxu0 %v2324
    %2377 = vmatprep.subr.bf16.mxu0 0
    %2378 = vmatpush2.bf16.msra.mxu0 %v2323
    %2379 = vmatprep.mubr.bf16.mxu0 %v2211
    %2380 = vmatmul.mubr.bf16.gmra.mxu0 %v2210
    %v2381 = vpop.f32.mrf.mxu0
    %v2382 = vadd.f32 %v2249, %v2381
    %v2383 = vpop.f32.mrf.mxu0
    %v2384 = vpop.f32.mrf.mxu0
    %v2385 = vadd.f32 %v2249, %v2384
    %v2386 = vpop.f32.mrf.mxu0
    %2387 = vdwg.mxu0
    %v2388 = vmul.f32 %v2382, 0.01
    %v2389 = vmul.f32 %v2385, 0.01
    %v2390 = vmax.f32 %v2382, %v2388
    %v2391 = vmax.f32 %v2385, %v2389
    %v2392 = vpack.c.bf16 %v2391, %v2390
    %v2393 = vld [vmem:[#allocation11] sm:$0xf]
    %v2394 = vld [vmem:[#allocation11 + $0x4] sm:$0xf]
    %v2395 = vld [vmem:[#allocation11 + $0x8] sm:$0xf]
    %v2396 = vld [vmem:[#allocation11 + $0xc] sm:$0xf]
    %v2397 = vld [vmem:[#allocation11 + $0x10] sm:$0xf]
    %v2398 = vld [vmem:[#allocation11 + $0x14] sm:$0xf]
    %v2399 = vld [vmem:[#allocation11 + $0x18] sm:$0xf]
    %v2400 = vld [vmem:[#allocation11 + $0x1c] sm:$0xf]
    %v2401 = vld [vmem:[#allocation11 + $0x20] sm:$0xf]
    %v2402 = vld [vmem:[#allocation11 + $0x24] sm:$0xf]
    %v2403 = vld [vmem:[#allocation11 + $0x28] sm:$0xf]
    %v2404 = vld [vmem:[#allocation11 + $0x2c] sm:$0xf]
    %v2405 = vld [vmem:[#allocation11 + $0x30] sm:$0xf]
    %v2406 = vld [vmem:[#allocation11 + $0x34] sm:$0xf]
    %v2407 = vld [vmem:[#allocation11 + $0x38] sm:$0xf]
    %v2408 = vld [vmem:[#allocation11 + $0x3c] sm:$0xf]
    %v2409 = vld [vmem:[%s8] sm:$0x1]
    %v2411 = vlaneseq
    %v2412 = vshrl.u32 %v2411, 7
    %v2413 = vsub.s32 0, %v2412
    %v2414 = vrot.slane %v2409, %v2413
    %v2432 = vunpack.c.l.b16 %v2393
    %v2433 = vunpack.c.l.b16 %v2394
    %v2434 = vunpack.c.l.b16 %v2395
    %v2435 = vunpack.c.l.b16 %v2396
    %v2436 = vunpack.c.l.b16 %v2397
    %v2437 = vunpack.c.l.b16 %v2398
    %v2438 = vunpack.c.l.b16 %v2399
    %v2439 = vunpack.c.l.b16 %v2400
    %v2440 = vunpack.c.l.b16 %v2401
    %v2441 = vunpack.c.l.b16 %v2402
    %v2442 = vunpack.c.l.b16 %v2403
    %v2443 = vunpack.c.l.b16 %v2404
    %v2444 = vunpack.c.l.b16 %v2405
    %v2445 = vunpack.c.l.b16 %v2406
    %v2446 = vunpack.c.l.b16 %v2407
    %v2447 = vunpack.c.l.b16 %v2408
    %v2448 = vpack.c.b16 %v2433, %v2432
    %v2449 = vpack.c.b16 %v2435, %v2434
    %v2450 = vpack.c.b16 %v2437, %v2436
    %v2451 = vpack.c.b16 %v2439, %v2438
    %v2452 = vpack.c.b16 %v2441, %v2440
    %v2453 = vpack.c.b16 %v2443, %v2442
    %v2454 = vpack.c.b16 %v2445, %v2444
    %v2455 = vpack.c.b16 %v2447, %v2446
    %2464 = vmatprep.subr.bf16.mxu0 0
    %2465 = vmatpush1.bf16.msra.mxu0 %v2455
    %2466 = vmatprep.subr.bf16.mxu0 0
    %2467 = vmatpush1.bf16.msra.mxu0 %v2454
    %2468 = vmatprep.subr.bf16.mxu0 0
    %2469 = vmatpush1.bf16.msra.mxu0 %v2453
    %2470 = vmatprep.subr.bf16.mxu0 0
    %2471 = vmatpush1.bf16.msra.mxu0 %v2452
    %2472 = vmatprep.subr.bf16.mxu0 0
    %2473 = vmatpush1.bf16.msra.mxu0 %v2451
    %2474 = vmatprep.subr.bf16.mxu0 0
    %2475 = vmatpush1.bf16.msra.mxu0 %v2450
    %2476 = vmatprep.subr.bf16.mxu0 0
    %2477 = vmatpush1.bf16.msra.mxu0 %v2449
    %2478 = vmatprep.subr.bf16.mxu0 0
    %2479 = vmatpush1.bf16.msra.mxu0 %v2448
    %2480 = vmatprep.subr.bf16.mxu0 0
    %2481 = vmatpush2.bf16.msra.mxu0 0
    %2482 = vmatprep.subr.bf16.mxu0 0
    %2483 = vmatpush2.bf16.msra.mxu0 0
    %2484 = vmatprep.subr.bf16.mxu0 0
    %2485 = vmatpush2.bf16.msra.mxu0 0
    %2486 = vmatprep.subr.bf16.mxu0 0
    %2487 = vmatpush2.bf16.msra.mxu0 0
    %2488 = vmatprep.subr.bf16.mxu0 0
    %2489 = vmatpush2.bf16.msra.mxu0 0
    %2490 = vmatprep.subr.bf16.mxu0 0
    %2491 = vmatpush2.bf16.msra.mxu0 0
    %2492 = vmatprep.subr.bf16.mxu0 0
    %2493 = vmatpush2.bf16.msra.mxu0 0
    %2494 = vmatprep.subr.bf16.mxu0 0
    %2495 = vmatpush2.bf16.msra.mxu0 0
    %2496 = vmatprep.mubr.bf16.mxu0 0
    %2497 = vmatmul.mubr.bf16.gmra.mxu0 %v2392
    %v2498 = vpop.f32.mrf.mxu0
    %v2499 = vadd.f32 %v2414, %v2498
    %v2500 = vpop.f32.mrf.mxu0
    %v2501 = vpop.f32.mrf.mxu0
    %v2502 = vadd.f32 %v2414, %v2501
    %v2503 = vpop.f32.mrf.mxu0
    %2504 = vdwg.mxu0
    %v2505 = vmul.f32 %v2499, 0.01
    %v2506 = vmul.f32 %v2502, 0.01
    %v2507 = vmax.f32 %v2499, %v2505
    %v2508 = vmax.f32 %v2502, %v2506
    %v2509 = vpack.c.bf16 %v2508, %v2507
    %v2510 = vld [vmem:[#allocation13] sm:$0xf]
    %v2511 = vld [vmem:[#allocation13 + $0x4] sm:$0xf]
    %v2512 = vld [vmem:[#allocation13 + $0x8] sm:$0xf]
    %v2513 = vld [vmem:[#allocation13 + $0xc] sm:$0xf]
    %v2514 = vld [vmem:[#allocation13 + $0x10] sm:$0xf]
    %v2515 = vld [vmem:[#allocation13 + $0x14] sm:$0xf]
    %v2516 = vld [vmem:[#allocation13 + $0x18] sm:$0xf]
    %v2517 = vld [vmem:[#allocation13 + $0x1c] sm:$0xf]
    %v2518 = vld [vmem:[#allocation13 + $0x20] sm:$0xf]
    %v2519 = vld [vmem:[#allocation13 + $0x24] sm:$0xf]
    %v2520 = vld [vmem:[#allocation13 + $0x28] sm:$0xf]
    %v2521 = vld [vmem:[#allocation13 + $0x2c] sm:$0xf]
    %v2522 = vld [vmem:[#allocation13 + $0x30] sm:$0xf]
    %v2523 = vld [vmem:[#allocation13 + $0x34] sm:$0xf]
    %v2524 = vld [vmem:[#allocation13 + $0x38] sm:$0xf]
    %v2525 = vld [vmem:[#allocation13 + $0x3c] sm:$0xf]
    %v2526 = vld [vmem:[%s10] sm:$0x1]
    %v2528 = vlaneseq
    %v2529 = vshrl.u32 %v2528, 7
    %v2530 = vsub.s32 0, %v2529
    %v2531 = vrot.slane %v2526, %v2530
    %v2549 = vunpack.c.l.b16 %v2510
    %v2550 = vunpack.c.l.b16 %v2511
    %v2551 = vunpack.c.l.b16 %v2512
    %v2552 = vunpack.c.l.b16 %v2513
    %v2553 = vunpack.c.l.b16 %v2514
    %v2554 = vunpack.c.l.b16 %v2515
    %v2555 = vunpack.c.l.b16 %v2516
    %v2556 = vunpack.c.l.b16 %v2517
    %v2557 = vunpack.c.l.b16 %v2518
    %v2558 = vunpack.c.l.b16 %v2519
    %v2559 = vunpack.c.l.b16 %v2520
    %v2560 = vunpack.c.l.b16 %v2521
    %v2561 = vunpack.c.l.b16 %v2522
    %v2562 = vunpack.c.l.b16 %v2523
    %v2563 = vunpack.c.l.b16 %v2524
    %v2564 = vunpack.c.l.b16 %v2525
    %v2565 = vpack.c.b16 %v2550, %v2549
    %v2566 = vpack.c.b16 %v2552, %v2551
    %v2567 = vpack.c.b16 %v2554, %v2553
    %v2568 = vpack.c.b16 %v2556, %v2555
    %v2569 = vpack.c.b16 %v2558, %v2557
    %v2570 = vpack.c.b16 %v2560, %v2559
    %v2571 = vpack.c.b16 %v2562, %v2561
    %v2572 = vpack.c.b16 %v2564, %v2563
    %2581 = vmatprep.subr.bf16.mxu0 0
    %2582 = vmatpush1.bf16.msra.mxu0 %v2572
    %2583 = vmatprep.subr.bf16.mxu0 0
    %2584 = vmatpush1.bf16.msra.mxu0 %v2571
    %2585 = vmatprep.subr.bf16.mxu0 0
    %2586 = vmatpush1.bf16.msra.mxu0 %v2570
    %2587 = vmatprep.subr.bf16.mxu0 0
    %2588 = vmatpush1.bf16.msra.mxu0 %v2569
    %2589 = vmatprep.subr.bf16.mxu0 0
    %2590 = vmatpush1.bf16.msra.mxu0 %v2568
    %2591 = vmatprep.subr.bf16.mxu0 0
    %2592 = vmatpush1.bf16.msra.mxu0 %v2567
    %2593 = vmatprep.subr.bf16.mxu0 0
    %2594 = vmatpush1.bf16.msra.mxu0 %v2566
    %2595 = vmatprep.subr.bf16.mxu0 0
    %2596 = vmatpush1.bf16.msra.mxu0 %v2565
    %2597 = vmatprep.subr.bf16.mxu0 0
    %2598 = vmatpush2.bf16.msra.mxu0 0
    %2599 = vmatprep.subr.bf16.mxu0 0
    %2600 = vmatpush2.bf16.msra.mxu0 0
    %2601 = vmatprep.subr.bf16.mxu0 0
    %2602 = vmatpush2.bf16.msra.mxu0 0
    %2603 = vmatprep.subr.bf16.mxu0 0
    %2604 = vmatpush2.bf16.msra.mxu0 0
    %2605 = vmatprep.subr.bf16.mxu0 0
    %2606 = vmatpush2.bf16.msra.mxu0 0
    %2607 = vmatprep.subr.bf16.mxu0 0
    %2608 = vmatpush2.bf16.msra.mxu0 0
    %2609 = vmatprep.subr.bf16.mxu0 0
    %2610 = vmatpush2.bf16.msra.mxu0 0
    %2611 = vmatprep.subr.bf16.mxu0 0
    %2612 = vmatpush2.bf16.msra.mxu0 0
    %2613 = vmatprep.mubr.bf16.mxu0 0
    %2614 = vmatmul.mubr.bf16.gmra.mxu0 %v2509
    %v2615 = vpop.f32.mrf.mxu0
    %v2616 = vadd.f32 %v2531, %v2615
    %v2617 = vpop.f32.mrf.mxu0
    %v2618 = vpop.f32.mrf.mxu0
    %v2619 = vadd.f32 %v2531, %v2618
    %v2620 = vpop.f32.mrf.mxu0
    %2621 = vdwg.mxu0
    %v2622 = vpack.c.bf16 %v2619, %v2616
    %v2624 = vunpack.c.l.b16 %v2622
    %v2625 = vunpack.c.h.b16 %v2622
    %v2626 = vpack.c.b16 %v2624, %v2624
    %v2627 = vpack.c.b16 %v2625, %v2625
    %2630 = vst [vmem:[#allocation14] sm:$0xf] %v2626
    %2631 = vst [vmem:[#allocation14 + $0x4] sm:$0xf] %v2627
    // Predicated region
    $region74: #{tpu_custom_call.1} parent=1 // pred_check
      _
    $region75: #{tpu_custom_call.1} parent=1 // pred_check_branch
      %2633 = sbr.rel (0) target = $region77
    $region76: #{tpu_custom_call.1} parent=1 // pred_region
      %s2635 = ssub.s32 128, 128
      %2636 = vsyncadd [#allocation4], %s2635
      %s2637 = sshll.u32 [#allocation14], 4
      %s2638 = int_to_ptr.vmem [resolvable:$true] %s2637
      %2643 = dma.vmem_to_hbm [thread:$0]  %s2638, 128, %s11, [#allocation4], 64, 64, 4
    $region77: #{tpu_custom_call.1} parent=1 // pred_fallthru
      _
    // Predicated region
    $region78: #{tpu_custom_call.1} parent=1 // pred_check
      _
    $region79: #{tpu_custom_call.1} parent=1 // pred_check_branch
      %2645 = sbr.rel (0) target = $region81
    $region80: #{tpu_custom_call.1} parent=1 // pred_region
      %2646 = dma.done [#allocation4], 128
    $region81: #{tpu_custom_call.1} parent=1 // pred_fallthru
      _
    %2647 = vsyncpa [#allocation3], 1
    %2648 = vsyncpa [#allocation6], 1
    %2649 = vsyncpa [#allocation9], 1
    %2650 = vsyncpa [#allocation12], 1
    %2651 = vsyncpa [#allocation4], 1

</llo_original>
